<compile_context>
chip_gen: v6e
topology: v6e:2x2x1
jax: 0.10.0
libtpu: 0.0.40
codegen_flags: <defaults>
</compile_context>

<pallas_src>
import functools

import numpy as np
import jax
import jax.numpy as jnp
from jax import lax
from jax.experimental import pallas as pl
from jax.experimental.pallas import tpu as pltpu


NEG = -1.0e30  # "-inf" stand-in (Python float -> jaxpr literal, NOT a captured constant)


def _round_up(x, m):
    return ((x + m - 1) // m) * m


def _pick_time_tile_and_vmem(T, Cp, Sp, BB, requested):
    """Pick the time tile so the working set stays inside a conservative VMEM budget
    (v7x: 64 MiB physical / ~32 MiB scoped) and return an explicit vmem limit."""
    def need(tt):
        lp_b = 2 * BB * tt * Cp * 4             # double-buffered log-prob input block
        em_b = tt * max(BB, 8) * Sp * 4         # emission scratch (sublane-padded)
        oh_b = BB * Cp * Sp * 2                 # persistent bf16 one-hot
        aux_b = 4 * BB * 8 * Sp * 4 + 4 * 8 * 128 * 4
        return lp_b + em_b + oh_b + aux_b + (2 << 20)

    if requested is not None:
        TT = max(8, _round_up(min(int(requested), max(T, 8)), 8))
    else:
        TT = max(8, min(256, _round_up(T, 8)))  # 256: fills the v6e MXU M dim
        budget = 24 << 20
        while TT > 8 and need(TT) > budget:
            TT = max(8, _round_up(TT // 2, 8))
    vmem_limit = int(min(max(need(TT) * 5 // 4, 32 << 20), 64 << 20))
    return TT, vmem_limit


# ----------------------------------------------------------------------------
# Pallas kernel: CTC negative log-likelihood (reduction='none') for a block of
# BB batch rows.  grid = (num_batch_blocks, num_time_chunks); alpha carries
# across time chunks in VMEM scratch.
# ----------------------------------------------------------------------------
def _ctc_kernel(maxt_ref, lastc_ref,              # scalar-prefetch (SMEM)
                lp_ref, ext_ref, aux_ref,         # VMEM inputs
                loss_ref,                         # VMEM output (revisited over chunks)
                alpha_ref, em_ref, oh_ref):       # VMEM scratch
    del lastc_ref                                 # only used by the lp index_map
    g = pl.program_id(0)
    tc = pl.program_id(1)
    n_tc = pl.num_programs(1)

    TT, BB, Sp = em_ref.shape
    Cp = lp_ref.shape[-1]

    maxT = maxt_ref[g]                            # max input length in this batch block
    t0 = tc * TT

    # Loop-invariant per-row masks, hoisted out of the serial recursion.
    aux = aux_ref[...]                            # (BB, 8, Sp) f32
    valid_s = aux[:, 0, :] > 0.5                  # s < 2*L_b + 1
    mask1 = aux[:, 1, :] > 0.5                    # s >= 1
    mask2 = aux[:, 2, :] > 0.5                    # s >= 2 and skip transition allowed
    final_m = aux[:, 3, :] > 0.5                  # s in {S_b-1, S_b-2}
    tlen = aux[:, 4, :]                           # per-row input length (f32)
    init_m = aux[:, 5, :] > 0.5                   # s <= 1 and s < S_b

    # ---- one-hot of the extended targets: built once per batch block, reused
    #      for every time chunk of that block (bf16 is exact for 0/1). ----
    @pl.when(tc == 0)
    def _build_onehot():
        ext = ext_ref[...]                        # (BB, 1, Sp) int32
        iota_c = lax.broadcasted_iota(jnp.int32, (Cp, Sp), 0)
        for r in range(BB):                       # static unroll
            oh_ref[r] = (iota_c == ext[r]).astype(jnp.bfloat16)

    # ---- emissions for this chunk: em[t, r, s] = lp[r, t0 + t, ext[r, s]] ----
    # hi/lo bf16 split: 2 native MXU passes, f32-accurate (one-hot exact in bf16).
    @pl.when(t0 < maxT)
    def _compute_emissions():
        lp = lp_ref[...]                          # (BB, TT, Cp) f32
        lp_hi = lp.astype(jnp.bfloat16)
        lp_lo = (lp - lp_hi.astype(jnp.float32)).astype(jnp.bfloat16)
        for r in range(BB):                       # static unroll of 2-D MXU matmuls
            oh_r = oh_ref[r]                      # (Cp, Sp) bf16
            em_r = (jnp.dot(lp_hi[r], oh_r, preferred_element_type=jnp.float32)
                    + jnp.dot(lp_lo[r], oh_r, preferred_element_type=jnp.float32))
            em_ref[:, r, :] = em_r                # (TT, Sp) into (TT, BB, Sp)

    # ---- t = 0 initialization (first chunk of each batch block) ----
    @pl.when(tc == 0)
    def _init_alpha():
        alpha_ref[...] = jnp.where(init_m, em_ref[0], NEG)

    # ---- alpha recursion over the valid timesteps of this chunk ----
    def step(t, alpha):
        a1 = jnp.where(mask1, pltpu.roll(alpha, 1, 1), NEG)   # alpha[s-1] (XLU)
        a2 = jnp.where(mask2, pltpu.roll(alpha, 2, 1), NEG)   # alpha[s-2]
        m = jnp.maximum(jnp.maximum(alpha, a1), a2)
        lse = m + jnp.log(jnp.exp(alpha - m) + jnp.exp(a1 - m) + jnp.exp(a2 - m))
        em_t = em_ref[t]                                      # (BB, Sp), one tile load
        t_g = (t0 + t).astype(jnp.float32)
        upd = valid_s & (t_g < tlen)              # per-row ragged length handling
        return jnp.where(upd, lse + em_t, alpha)

    start = jnp.maximum(t0, 1) - t0               # global t = 0 handled by init
    stop = jnp.clip(maxT - t0, 0, TT)             # no iterations on padded chunks
    alpha_ref[...] = lax.fori_loop(start, stop, step, alpha_ref[...])

    # ---- finalize: loss = -logsumexp(alpha[S-1], alpha[S-2]) ----
    @pl.when(tc == n_tc - 1)
    def _finalize():
        masked = jnp.where(final_m, alpha_ref[...], NEG)
        mmax = jnp.max(masked, axis=1, keepdims=True)
        lse = mmax + jnp.log(jnp.sum(jnp.exp(masked - mmax), axis=1, keepdims=True))
        loss_ref[...] = jnp.broadcast_to((-lse)[:, :, None], loss_ref.shape)


@functools.partial(jax.jit, static_argnums=(4, 5))
def _ctc_loss_impl(log_probs, targets, input_lengths, target_lengths, blank, time_tile):
    log_probs = jnp.asarray(log_probs, jnp.float32)
    targets = jnp.asarray(targets, jnp.int32)
    input_lengths = jnp.asarray(input_lengths, jnp.int32)
    target_lengths = jnp.asarray(target_lengths, jnp.int32)

    B, T, C = log_probs.shape
    Lmax = targets.shape[1]
    Smax = 2 * Lmax + 1

    Cp = _round_up(C, 128)
    Sp = _round_up(Smax, 128)

    # Batch packing: fill the vreg sublanes with batch rows, but keep >= 2 batch
    # blocks when possible so both v7x TensorCores get work on the parallel axis.
    if B >= 16:
        BB = 8
    elif B >= 2:
        BB = max(1, min(8, B // 2))
    else:
        BB = 1
    Bp = _round_up(B, BB)
    nblk = Bp // BB

    TT, vmem_limit = _pick_time_tile_and_vmem(T, Cp, Sp, BB, time_tile)
    Tp = _round_up(T, TT)
    n_tc = Tp // TT

    # Pad vocab to a lane multiple, time to a tile multiple, batch to a block multiple.
    lp_pad = jnp.pad(log_probs, ((0, Bp - B), (0, Tp - T), (0, Cp - C)))
    tg_p = jnp.pad(targets, ((0, Bp - B), (0, 0)))
    il_p = jnp.clip(jnp.pad(input_lengths, (0, Bp - B)), 0, T)
    tl_p = jnp.clip(jnp.pad(target_lengths, (0, Bp - B)), 0, Lmax)

    # Extended (blank-interleaved) targets: [blank, t0, blank, t1, ..., blank]
    ext = jnp.full((Bp, Smax), blank, dtype=jnp.int32)
    ext = ext.at[:, 1::2].set(tg_p)
    ext = jnp.pad(ext, ((0, 0), (0, Sp - Smax)), constant_values=blank)

    s_idx = jnp.arange(Sp, dtype=jnp.int32)[None, :]
    S_b = (2 * tl_p + 1)[:, None]
    prev2 = jnp.concatenate(
        [jnp.full((Bp, 2), blank, jnp.int32), ext[:, :-2]], axis=1)

    valid = (s_idx < S_b)
    mask1 = jnp.broadcast_to(s_idx >= 1, (Bp, Sp))
    mask2 = (s_idx >= 2) & (ext != blank) & (ext != prev2)
    final_m = (s_idx == S_b - 1) | (s_idx == S_b - 2)
    init_m = valid & (s_idx <= 1)
    tlen = jnp.broadcast_to(il_p[:, None].astype(jnp.float32), (Bp, Sp))
    zero = jnp.zeros((Bp, Sp), jnp.float32)

    aux = jnp.stack([valid.astype(jnp.float32), mask1.astype(jnp.float32),
                     mask2.astype(jnp.float32), final_m.astype(jnp.float32),
                     tlen, init_m.astype(jnp.float32), zero, zero],
                    axis=1)                       # (Bp, 8, Sp) f32
    ext3 = ext[:, None, :]                        # (Bp, 1, Sp) int32

    # Per-block max length (gating + trip counts) and last valid time chunk
    # (index_map clamp -> Pallas skips the re-DMA of fully padded chunks).
    il_blk = il_p.reshape(nblk, BB)
    maxT_blk = jnp.clip(jnp.max(il_blk, axis=1), 1, T).astype(jnp.int32)
    lastc_blk = jnp.maximum((maxT_blk + (TT - 1)) // TT - 1, 0).astype(jnp.int32)

    out = pl.pallas_call(
        _ctc_kernel,
        out_shape=jax.ShapeDtypeStruct((Bp, 1, 128), jnp.float32),
        grid_spec=pltpu.PrefetchScalarGridSpec(
            num_scalar_prefetch=2,
            grid=(nblk, n_tc),
            in_specs=[
                pl.BlockSpec((BB, TT, Cp),
                             lambda g, t, mt, lc: (g, jnp.minimum(t, lc[g]), 0)),
                pl.BlockSpec((BB, 1, Sp), lambda g, t, mt, lc: (g, 0, 0)),
                pl.BlockSpec((BB, 8, Sp), lambda g, t, mt, lc: (g, 0, 0)),
            ],
            out_specs=pl.BlockSpec((BB, 1, 128), lambda g, t, mt, lc: (g, 0, 0)),
            scratch_shapes=[
                pltpu.VMEM((BB, Sp), jnp.float32),       # alpha carry across chunks
                pltpu.VMEM((TT, BB, Sp), jnp.float32),   # per-chunk emissions
                pltpu.VMEM((BB, Cp, Sp), jnp.bfloat16),  # per-block one-hot (hoisted)
            ],
        ),
        compiler_params=pltpu.CompilerParams(
            dimension_semantics=("parallel", "arbitrary"),
            vmem_limit_bytes=vmem_limit),
    )(maxT_blk, lastc_blk, lp_pad, ext3, aux)

    return out[:B, 0, 0]


def ctc_loss_pallas(log_probs, targets, input_lengths, target_lengths,
                    blank=0, time_tile=None):
    """Per-sample CTC loss (reduction='none'), computed by the Pallas kernel."""
    return _ctc_loss_impl(log_probs, targets, input_lengths, target_lengths,
                          int(blank), None if time_tile is None else int(time_tile))


# ----------------------------------------------------------------------------
# DROCTCLoss — glue mirroring the PyTorch module (CTC compute goes to Pallas)
# ----------------------------------------------------------------------------
class DROCTCLoss:
    def __init__(self, blank=0, reduction='mean', zero_infinity=False,
                 dro_group_count=0, dro_step_size=0.01, dro_q_epsilon=1e-10,
                 accumulation=False, smoothing=0, agg='sum', normalize_grad=True):
        self.blank = blank
        self.reduction = reduction
        self.zero_infinity = zero_infinity
        self.dro_group_count = dro_group_count
        self.dro_step_size = dro_step_size
        self.dro_q = jnp.ones((dro_group_count,), jnp.float32) / dro_group_count
        self.dro_q_epsilon = dro_q_epsilon
        self.group_id_to_ix = {}
        self.agg = agg
        self.normalize_grad = normalize_grad
        self.accumulation = accumulation
        self.smoothing = smoothing
        self.utt2category = {}
        self.group_losses = {i: [] for i in range(dro_group_count)}

    def forward(self, log_probs, targets, input_lengths, target_lengths,
                utt_id, valid=True):
        # layout: log_probs (B, T, C); kernel handles the F.ctc_loss equivalent.
        losses = ctc_loss_pallas(log_probs, targets, input_lengths,
                                 target_lengths, self.blank)
        if self.zero_infinity:
            # NEG sentinel surviving the recursion marks infeasible samples.
            losses = jnp.where(losses > 1e29, 0.0, losses)

        batch_lang_ids = [self.utt2category[u] for u in utt_id]
        batch_lang_q_indices = []
        for lang_id in batch_lang_ids:
            if lang_id not in self.group_id_to_ix:
                self.group_id_to_ix[lang_id] = len(self.group_id_to_ix)
            batch_lang_q_indices.append(self.group_id_to_ix[lang_id])

        # TODO(synk): per-sample / update-magnitude / normalized-q prints of the
        #             reference module are omitted (host-side logging only).
        step_size = self.dro_step_size
        if not valid:
            for q_ix in set(batch_lang_q_indices):
                grp = jnp.stack([losses[i] for i in range(losses.shape[0])
                                 if batch_lang_q_indices[i] == q_ix])
                group_mean_loss = jnp.sum(grp) if self.agg == 'sum' else jnp.mean(grp)
                if not self.accumulation:
                    if self.smoothing > 0:
                        upd = jnp.exp(group_mean_loss * step_size /
                                      (self.dro_q[q_ix] + self.smoothing))
                    else:
                        upd = jnp.exp(group_mean_loss * step_size)
                    self.dro_q = self.dro_q.at[q_ix].multiply(upd)
                else:
                    self.group_losses[q_ix].append(group_mean_loss)
            if self.accumulation:
                if all(len(v) > 0 for v in self.group_losses.values()):
                    for gix, vals in self.group_losses.items():
                        update_term = sum(vals) / len(vals)
                        if self.smoothing > 0:
                            upd = jnp.exp(update_term * step_size /
                                          (self.dro_q[gix] + self.smoothing))
                        else:
                            upd = jnp.exp(update_term * step_size)
                        self.dro_q = self.dro_q.at[gix].multiply(upd)
                    self.normalize_dro_q()
                    self.group_losses = {k: [] for k in self.group_losses}
            else:
                self.normalize_dro_q()

        q_idx = jnp.array(batch_lang_q_indices, jnp.int32)
        if self.normalize_grad:
            dro_losses = losses * self.dro_q[q_idx] * self.dro_group_count
        else:
            dro_losses = losses * self.dro_q[q_idx]
        return dro_losses if not valid else losses

    def normalize_dro_q(self):
        q = self.dro_q + self.dro_q_epsilon
        self.dro_q = q / jnp.sum(q)


# ----------------------------------------------------------------------------
# Pure-numpy CTC reference (for correctness check of the Pallas kernel)
# ----------------------------------------------------------------------------
def ctc_ref_numpy(log_probs, targets, input_lengths, target_lengths, blank=0):
    lp = np.asarray(log_probs, dtype=np.float64)
    tg = np.asarray(targets)
    il = np.asarray(input_lengths)
    tl = np.asarray(target_lengths)
    B = lp.shape[0]
    neg = -1.0e30
    out = np.zeros(B)
    for b in range(B):
        T, L = int(il[b]), int(tl[b])
        ext = [blank]
        for k in range(L):
            ext += [int(tg[b, k]), blank]
        S = 2 * L + 1
        alpha = np.full(S, neg)
        alpha[0] = lp[b, 0, blank]
        if S > 1:
            alpha[1] = lp[b, 0, ext[1]]
        for t in range(1, T):
            new = np.full(S, neg)
            for s in range(S):
                terms = [alpha[s]]
                if s >= 1:
                    terms.append(alpha[s - 1])
                if s >= 2 and ext[s] != blank and ext[s] != ext[s - 2]:
                    terms.append(alpha[s - 2])
                m = max(terms)
                new[s] = m + np.log(np.sum(np.exp(np.array(terms) - m))) + lp[b, t, ext[s]]
            alpha = new
        terms = [alpha[S - 1]]
        if S >= 2:
            terms.append(alpha[S - 2])
        m = max(terms)
        out[b] = -(m + np.log(np.sum(np.exp(np.array(terms) - m))))
    return out


if __name__ == "__main__":
    key = jax.random.PRNGKey(0)
    k1, k2, k3, k4 = jax.random.split(key, 4)

    # --- test 1: single time chunk, Sp == 128, batch packing BB = 2 ---
    B, T, C, Lmax = 4, 16, 32, 5
    logits = jax.random.normal(k1, (B, T, C), jnp.float32)
    log_probs = jax.nn.log_softmax(logits, axis=-1)           # (B, T, C)
    targets = jax.random.randint(k2, (B, Lmax), 1, C)         # avoid blank=0
    input_lengths = jnp.array([16, 14, 12, 16], jnp.int32)
    target_lengths = jnp.array([5, 4, 3, 5], jnp.int32)

    losses = jax.block_until_ready(
        ctc_loss_pallas(log_probs, targets, input_lengths, target_lengths, 0))
    ref = ctc_ref_numpy(log_probs, targets, input_lengths, target_lengths, 0)
    assert np.allclose(np.asarray(losses), ref, rtol=1e-3, atol=5e-3), (
        np.asarray(losses), ref)

    # --- test 2: multiple time chunks (alpha carry), ragged lengths spanning chunk
    #     boundaries, Sp = 256 (exercises roll wrap-around masking + DMA-skip clamp) ---
    B2, T2, C2, Lmax2 = 2, 80, 32, 70
    logits2 = jax.random.normal(k3, (B2, T2, C2), jnp.float32)
    log_probs2 = jax.nn.log_softmax(logits2, axis=-1)
    targets2 = jax.random.randint(k4, (B2, Lmax2), 1, C2)
    input_lengths2 = jnp.array([80, 47], jnp.int32)
    target_lengths2 = jnp.array([40, 20], jnp.int32)
    losses2 = jax.block_until_ready(
        ctc_loss_pallas(log_probs2, targets2, input_lengths2, target_lengths2, 0,
                        time_tile=32))
    ref2 = ctc_ref_numpy(log_probs2, targets2, input_lengths2, target_lengths2, 0)
    assert np.allclose(np.asarray(losses2), ref2, rtol=1e-3, atol=5e-3), (
        np.asarray(losses2), ref2)

    # --- DRO module forward (training + validation modes) ---
    module = DROCTCLoss(blank=0, dro_group_count=2, dro_step_size=0.01,
                        agg='sum', normalize_grad=True)
    # Deterministic in-script category table (replaces init_weights file loading).
    module.utt2category = {"utt0": "en", "utt1": "de", "utt2": "en", "utt3": "de"}
    utt_ids = ["utt0", "utt1", "utt2", "utt3"]

    dro_losses = module.forward(log_probs, targets, input_lengths, target_lengths,
                                utt_ids, valid=False)
    val_losses = module.forward(log_probs, targets, input_lengths, target_lengths,
                                utt_ids, valid=True)
    jax.block_until_ready(dro_losses)
    jax.block_until_ready(val_losses)
    print("KERNEL_OK")
</pallas_src>

<mosaic_0001>
module attributes {stable_mosaic.version = 11 : i64} {
  func.func @_ctc_kernel(%arg0: i32, %arg1: i32, %arg2: memref<2xi32, #tpu.memory_space<smem>>, %arg3: memref<2xi32, #tpu.memory_space<smem>>, %arg4: memref<2x16x128xf32, #tpu.memory_space<vmem>>, %arg5: memref<2x1x128xi32, #tpu.memory_space<vmem>>, %arg6: memref<2x8x128xf32, #tpu.memory_space<vmem>>, %arg7: memref<2x1x128xf32, #tpu.memory_space<vmem>>, %arg8: memref<2x128xf32, #tpu.memory_space<vmem>>, %arg9: memref<16x2x128xf32, #tpu.memory_space<vmem>>, %arg10: memref<2x128x128xbf16, #tpu.memory_space<vmem>>) attributes {dimension_semantics = [#tpu.dimension_semantics<parallel>, #tpu.dimension_semantics<arbitrary>], iteration_bounds = array<i64: 2, 1>, scalar_prefetch = 2 : i64, scratch_operands = 3 : i64, tpu.core_type = #tpu.core_type<tc>, window_params = [{transform_indices = @transform_0, window_bounds = array<i64: 2, 16, 128>}, {transform_indices = @transform_1, window_bounds = array<i64: 2, 1, 128>}, {transform_indices = @transform_2, window_bounds = array<i64: 2, 8, 128>}, {transform_indices = @transform_3, window_bounds = array<i64: 2, 1, 128>}]} {
    %0 = arith.index_cast %arg0 : i32 to index
    %1 = memref.load %arg2[%0] : memref<2xi32, #tpu.memory_space<smem>>
    %c16_i32 = arith.constant 16 : i32
    %2 = arith.muli %arg1, %c16_i32 : i32
    %c0 = arith.constant 0 : index
    %c0_0 = arith.constant 0 : index
    %c0_1 = arith.constant 0 : index
    %3 = vector.load %arg6[%c0, %c0_0, %c0_1] : memref<2x8x128xf32, #tpu.memory_space<vmem>>, vector<2x8x128xf32>
    %4 = vector.extract_strided_slice %3 {offsets = [0, 0, 0], sizes = [2, 1, 128], strides = [1, 1, 1]} : vector<2x8x128xf32> to vector<2x1x128xf32>
    %5 = vector.shape_cast %4 : vector<2x1x128xf32> to vector<2x128xf32>
    %cst = arith.constant 5.000000e-01 : f32
    %6 = vector.broadcast %cst : f32 to vector<2x128xf32>
    %7 = arith.cmpf ogt, %5, %6 : vector<2x128xf32>
    %8 = vector.extract_strided_slice %3 {offsets = [0, 1, 0], sizes = [2, 1, 128], strides = [1, 1, 1]} : vector<2x8x128xf32> to vector<2x1x128xf32>
    %9 = vector.shape_cast %8 : vector<2x1x128xf32> to vector<2x128xf32>
    %cst_2 = arith.constant 5.000000e-01 : f32
    %10 = vector.broadcast %cst_2 : f32 to vector<2x128xf32>
    %11 = arith.cmpf ogt, %9, %10 : vector<2x128xf32>
    %12 = vector.extract_strided_slice %3 {offsets = [0, 2, 0], sizes = [2, 1, 128], strides = [1, 1, 1]} : vector<2x8x128xf32> to vector<2x1x128xf32>
    %13 = vector.shape_cast %12 : vector<2x1x128xf32> to vector<2x128xf32>
    %cst_3 = arith.constant 5.000000e-01 : f32
    %14 = vector.broadcast %cst_3 : f32 to vector<2x128xf32>
    %15 = arith.cmpf ogt, %13, %14 : vector<2x128xf32>
    %16 = vector.extract_strided_slice %3 {offsets = [0, 3, 0], sizes = [2, 1, 128], strides = [1, 1, 1]} : vector<2x8x128xf32> to vector<2x1x128xf32>
    %17 = vector.shape_cast %16 : vector<2x1x128xf32> to vector<2x128xf32>
    %cst_4 = arith.constant 5.000000e-01 : f32
    %18 = vector.broadcast %cst_4 : f32 to vector<2x128xf32>
    %19 = arith.cmpf ogt, %17, %18 : vector<2x128xf32>
    %20 = vector.extract_strided_slice %3 {offsets = [0, 4, 0], sizes = [2, 1, 128], strides = [1, 1, 1]} : vector<2x8x128xf32> to vector<2x1x128xf32>
    %21 = vector.shape_cast %20 : vector<2x1x128xf32> to vector<2x128xf32>
    %22 = vector.extract_strided_slice %3 {offsets = [0, 5, 0], sizes = [2, 1, 128], strides = [1, 1, 1]} : vector<2x8x128xf32> to vector<2x1x128xf32>
    %23 = vector.shape_cast %22 : vector<2x1x128xf32> to vector<2x128xf32>
    %cst_5 = arith.constant 5.000000e-01 : f32
    %24 = vector.broadcast %cst_5 : f32 to vector<2x128xf32>
    %25 = arith.cmpf ogt, %23, %24 : vector<2x128xf32>
    %c0_i32 = arith.constant 0 : i32
    %26 = arith.cmpi eq, %arg1, %c0_i32 : i32
    %27 = arith.extui %26 : i1 to i32
    %c0_i32_6 = arith.constant 0 : i32
    %28 = arith.cmpi ne, %27, %c0_i32_6 : i32
    scf.if %28 {
      %c0_19 = arith.constant 0 : index
      %c0_20 = arith.constant 0 : index
      %c0_21 = arith.constant 0 : index
      %48 = vector.load %arg5[%c0_19, %c0_20, %c0_21] : memref<2x1x128xi32, #tpu.memory_space<vmem>>, vector<2x1x128xi32>
      %49 = tpu.iota {dimensions = array<i32: 0>} : vector<128x128xi32>
      %50 = vector.extract_strided_slice %48 {offsets = [0, 0, 0], sizes = [1, 1, 128], strides = [1, 1, 1]} : vector<2x1x128xi32> to vector<1x1x128xi32>
      %51 = vector.shape_cast %50 : vector<1x1x128xi32> to vector<1x128xi32>
      %52 = vector.broadcast %51 : vector<1x128xi32> to vector<128x128xi32>
      %53 = arith.cmpi eq, %49, %52 : vector<128x128xi32>
      %54 = arith.extui %53 : vector<128x128xi1> to vector<128x128xi32>
      %55 = arith.sitofp %54 : vector<128x128xi32> to vector<128x128xf32>
      %56 = arith.truncf %55 : vector<128x128xf32> to vector<128x128xbf16>
      %c0_22 = arith.constant 0 : index
      %c0_23 = arith.constant 0 : index
      %c0_24 = arith.constant 0 : index
      %57 = vector.load %arg10[%c0_22, %c0_23, %c0_24] : memref<2x128x128xbf16, #tpu.memory_space<vmem>>, vector<1x128x128xbf16>
      %58 = vector.shape_cast %57 : vector<1x128x128xbf16> to vector<128x128xbf16>
      %59 = vector.shape_cast %56 : vector<128x128xbf16> to vector<1x128x128xbf16>
      tpu.vector_store %arg10[%c0_22, %c0_23, %c0_24], %59 {strides = array<i32>} : memref<2x128x128xbf16, #tpu.memory_space<vmem>>, vector<1x128x128xbf16>,
      %60 = vector.extract_strided_slice %48 {offsets = [1, 0, 0], sizes = [1, 1, 128], strides = [1, 1, 1]} : vector<2x1x128xi32> to vector<1x1x128xi32>
      %61 = vector.shape_cast %60 : vector<1x1x128xi32> to vector<1x128xi32>
      %62 = vector.broadcast %61 : vector<1x128xi32> to vector<128x128xi32>
      %63 = arith.cmpi eq, %49, %62 : vector<128x128xi32>
      %64 = arith.extui %63 : vector<128x128xi1> to vector<128x128xi32>
      %65 = arith.sitofp %64 : vector<128x128xi32> to vector<128x128xf32>
      %66 = arith.truncf %65 : vector<128x128xf32> to vector<128x128xbf16>
      %c1 = arith.constant 1 : index
      %c0_25 = arith.constant 0 : index
      %c0_26 = arith.constant 0 : index
      %67 = vector.load %arg10[%c1, %c0_25, %c0_26] : memref<2x128x128xbf16, #tpu.memory_space<vmem>>, vector<1x128x128xbf16>
      %68 = vector.shape_cast %67 : vector<1x128x128xbf16> to vector<128x128xbf16>
      %69 = vector.shape_cast %66 : vector<128x128xbf16> to vector<1x128x128xbf16>
      tpu.vector_store %arg10[%c1, %c0_25, %c0_26], %69 {strides = array<i32>} : memref<2x128x128xbf16, #tpu.memory_space<vmem>>, vector<1x128x128xbf16>,
    } else {
    }
    %29 = arith.cmpi slt, %2, %1 : i32
    %30 = arith.extui %29 : i1 to i32
    %c0_i32_7 = arith.constant 0 : i32
    %31 = arith.cmpi ne, %30, %c0_i32_7 : i32
    scf.if %31 {
      %c0_19 = arith.constant 0 : index
      %c0_20 = arith.constant 0 : index
      %c0_21 = arith.constant 0 : index
      %48 = vector.load %arg4[%c0_19, %c0_20, %c0_21] : memref<2x16x128xf32, #tpu.memory_space<vmem>>, vector<2x16x128xf32>
      %49 = arith.truncf %48 : vector<2x16x128xf32> to vector<2x16x128xbf16>
      %50 = arith.extf %49 : vector<2x16x128xbf16> to vector<2x16x128xf32>
      %51 = arith.subf %48, %50 : vector<2x16x128xf32>
      %52 = arith.truncf %51 : vector<2x16x128xf32> to vector<2x16x128xbf16>
      %c0_22 = arith.constant 0 : index
      %c0_23 = arith.constant 0 : index
      %c0_24 = arith.constant 0 : index
      %53 = vector.load %arg10[%c0_22, %c0_23, %c0_24] : memref<2x128x128xbf16, #tpu.memory_space<vmem>>, vector<1x128x128xbf16>
      %54 = vector.shape_cast %53 : vector<1x128x128xbf16> to vector<128x128xbf16>
      %55 = vector.extract_strided_slice %49 {offsets = [0, 0, 0], sizes = [1, 16, 128], strides = [1, 1, 1]} : vector<2x16x128xbf16> to vector<1x16x128xbf16>
      %56 = vector.shape_cast %55 : vector<1x16x128xbf16> to vector<16x128xbf16>
      %cst_25 = arith.constant dense<0.000000e+00> : vector<16x128xf32>
      %57 = tpu.matmul %56, %54, %cst_25 {dimension_numbers = #tpu.dot_dimension_numbers<[1], [0], [0], [1], [0, 0, 1, 1], [], []>} : vector<16x128xbf16>, vector<128x128xbf16>, vector<16x128xf32> -> vector<16x128xf32>
      %58 = vector.extract_strided_slice %52 {offsets = [0, 0, 0], sizes = [1, 16, 128], strides = [1, 1, 1]} : vector<2x16x128xbf16> to vector<1x16x128xbf16>
      %59 = vector.shape_cast %58 : vector<1x16x128xbf16> to vector<16x128xbf16>
      %cst_26 = arith.constant dense<0.000000e+00> : vector<16x128xf32>
      %60 = tpu.matmul %59, %54, %cst_26 {dimension_numbers = #tpu.dot_dimension_numbers<[1], [0], [0], [1], [0, 0, 1, 1], [], []>} : vector<16x128xbf16>, vector<128x128xbf16>, vector<16x128xf32> -> vector<16x128xf32>
      %61 = arith.addf %57, %60 : vector<16x128xf32>
      %c0_27 = arith.constant 0 : index
      %c0_28 = arith.constant 0 : index
      %c0_29 = arith.constant 0 : index
      %62 = vector.load %arg9[%c0_27, %c0_28, %c0_29] : memref<16x2x128xf32, #tpu.memory_space<vmem>>, vector<16x1x128xf32>
      %63 = vector.shape_cast %62 : vector<16x1x128xf32> to vector<16x128xf32>
      %64 = vector.shape_cast %61 : vector<16x128xf32> to vector<16x1x128xf32>
      tpu.vector_store %arg9[%c0_27, %c0_28, %c0_29], %64 {strides = array<i32>} : memref<16x2x128xf32, #tpu.memory_space<vmem>>, vector<16x1x128xf32>,
      %c1 = arith.constant 1 : index
      %c0_30 = arith.constant 0 : index
      %c0_31 = arith.constant 0 : index
      %65 = vector.load %arg10[%c1, %c0_30, %c0_31] : memref<2x128x128xbf16, #tpu.memory_space<vmem>>, vector<1x128x128xbf16>
      %66 = vector.shape_cast %65 : vector<1x128x128xbf16> to vector<128x128xbf16>
      %67 = vector.extract_strided_slice %49 {offsets = [1, 0, 0], sizes = [1, 16, 128], strides = [1, 1, 1]} : vector<2x16x128xbf16> to vector<1x16x128xbf16>
      %68 = vector.shape_cast %67 : vector<1x16x128xbf16> to vector<16x128xbf16>
      %cst_32 = arith.constant dense<0.000000e+00> : vector<16x128xf32>
      %69 = tpu.matmul %68, %66, %cst_32 {dimension_numbers = #tpu.dot_dimension_numbers<[1], [0], [0], [1], [0, 0, 1, 1], [], []>} : vector<16x128xbf16>, vector<128x128xbf16>, vector<16x128xf32> -> vector<16x128xf32>
      %70 = vector.extract_strided_slice %52 {offsets = [1, 0, 0], sizes = [1, 16, 128], strides = [1, 1, 1]} : vector<2x16x128xbf16> to vector<1x16x128xbf16>
      %71 = vector.shape_cast %70 : vector<1x16x128xbf16> to vector<16x128xbf16>
      %cst_33 = arith.constant dense<0.000000e+00> : vector<16x128xf32>
      %72 = tpu.matmul %71, %66, %cst_33 {dimension_numbers = #tpu.dot_dimension_numbers<[1], [0], [0], [1], [0, 0, 1, 1], [], []>} : vector<16x128xbf16>, vector<128x128xbf16>, vector<16x128xf32> -> vector<16x128xf32>
      %73 = arith.addf %69, %72 : vector<16x128xf32>
      %c0_34 = arith.constant 0 : index
      %c1_35 = arith.constant 1 : index
      %c0_36 = arith.constant 0 : index
      %74 = vector.load %arg9[%c0_34, %c1_35, %c0_36] : memref<16x2x128xf32, #tpu.memory_space<vmem>>, vector<16x1x128xf32>
      %75 = vector.shape_cast %74 : vector<16x1x128xf32> to vector<16x128xf32>
      %76 = vector.shape_cast %73 : vector<16x128xf32> to vector<16x1x128xf32>
      tpu.vector_store %arg9[%c0_34, %c1_35, %c0_36], %76 {strides = array<i32>} : memref<16x2x128xf32, #tpu.memory_space<vmem>>, vector<16x1x128xf32>,
    } else {
    }
    %c0_i32_8 = arith.constant 0 : i32
    %32 = arith.cmpi eq, %arg1, %c0_i32_8 : i32
    %33 = arith.extui %32 : i1 to i32
    %c0_i32_9 = arith.constant 0 : i32
    %34 = arith.cmpi ne, %33, %c0_i32_9 : i32
    scf.if %34 {
      %c0_19 = arith.constant 0 : index
      %c0_20 = arith.constant 0 : index
      %c0_21 = arith.constant 0 : index
      %48 = vector.load %arg9[%c0_19, %c0_20, %c0_21] : memref<16x2x128xf32, #tpu.memory_space<vmem>>, vector<1x2x128xf32>
      %49 = vector.shape_cast %48 : vector<1x2x128xf32> to vector<2x128xf32>
      %cst_22 = arith.constant -1.000000e+30 : f32
      %50 = vector.broadcast %cst_22 : f32 to vector<2x128xf32>
      %51 = arith.select %25, %49, %50 : vector<2x128xi1>, vector<2x128xf32>
      %c0_23 = arith.constant 0 : index
      %c0_24 = arith.constant 0 : index
      %52 = vector.load %arg8[%c0_23, %c0_24] : memref<2x128xf32, #tpu.memory_space<vmem>>, vector<2x128xf32>
      tpu.vector_store %arg8[%c0_23, %c0_24], %51 {strides = array<i32>} : memref<2x128xf32, #tpu.memory_space<vmem>>, vector<2x128xf32>,
    } else {
    }
    %c1_i32 = arith.constant 1 : i32
    %35 = arith.maxsi %2, %c1_i32 : i32
    %36 = arith.subi %35, %2 : i32
    %37 = arith.subi %1, %2 : i32
    %c0_i32_10 = arith.constant 0 : i32
    %c16_i32_11 = arith.constant 16 : i32
    %38 = arith.maxsi %c0_i32_10, %37 : i32
    %39 = arith.minsi %c16_i32_11, %38 : i32
    %c0_12 = arith.constant 0 : index
    %c0_13 = arith.constant 0 : index
    %40 = vector.load %arg8[%c0_12, %c0_13] : memref<2x128xf32, #tpu.memory_space<vmem>>, vector<2x128xf32>
    %41 = arith.subi %39, %36 : i32
    %42 = arith.addi %36, %41 : i32
    %c1_i32_14 = arith.constant 1 : i32
    %43 = scf.for %arg11 = %36 to %42 step %c1_i32_14 iter_args(%arg12 = %40) -> (vector<2x128xf32>)  : i32 {
      %c1_i32_19 = arith.constant 1 : i32
      %48 = tpu.dynamic_rotate %arg12 by %c1_i32_19 dim 1 : vector<2x128xf32>, i32 -> vector<2x128xf32>
      %cst_20 = arith.constant -1.000000e+30 : f32
      %49 = vector.broadcast %cst_20 : f32 to vector<2x128xf32>
      %50 = arith.select %11, %48, %49 : vector<2x128xi1>, vector<2x128xf32>
      %c2_i32 = arith.constant 2 : i32
      %51 = tpu.dynamic_rotate %arg12 by %c2_i32 dim 1 : vector<2x128xf32>, i32 -> vector<2x128xf32>
      %cst_21 = arith.constant -1.000000e+30 : f32
      %52 = vector.broadcast %cst_21 : f32 to vector<2x128xf32>
      %53 = arith.select %15, %51, %52 : vector<2x128xi1>, vector<2x128xf32>
      %54 = arith.maximumf %arg12, %50 : vector<2x128xf32>
      %55 = arith.maximumf %54, %53 : vector<2x128xf32>
      %56 = arith.subf %arg12, %55 : vector<2x128xf32>
      %57 = math.exp %56 : vector<2x128xf32>
      %58 = arith.subf %50, %55 : vector<2x128xf32>
      %59 = math.exp %58 : vector<2x128xf32>
      %60 = arith.addf %57, %59 : vector<2x128xf32>
      %61 = arith.subf %53, %55 : vector<2x128xf32>
      %62 = math.exp %61 : vector<2x128xf32>
      %63 = arith.addf %60, %62 : vector<2x128xf32>
      %64 = math.log %63 : vector<2x128xf32>
      %65 = arith.addf %55, %64 : vector<2x128xf32>
      %66 = arith.index_cast %arg11 : i32 to index
      %c0_22 = arith.constant 0 : index
      %c0_23 = arith.constant 0 : index
      %67 = vector.load %arg9[%66, %c0_22, %c0_23] : memref<16x2x128xf32, #tpu.memory_space<vmem>>, vector<1x2x128xf32>
      %68 = vector.shape_cast %67 : vector<1x2x128xf32> to vector<2x128xf32>
      %69 = arith.addi %2, %arg11 : i32
      %70 = arith.sitofp %69 : i32 to f32
      %71 = vector.broadcast %70 : f32 to vector<2x128xf32>
      %72 = arith.cmpf olt, %71, %21 : vector<2x128xf32>
      %73 = arith.andi %7, %72 : vector<2x128xi1>
      %74 = arith.addf %65, %68 : vector<2x128xf32>
      %75 = arith.select %73, %74, %arg12 : vector<2x128xi1>, vector<2x128xf32>
      scf.yield %75 : vector<2x128xf32>
    }
    %c0_15 = arith.constant 0 : index
    %c0_16 = arith.constant 0 : index
    %44 = vector.load %arg8[%c0_15, %c0_16] : memref<2x128xf32, #tpu.memory_space<vmem>>, vector<2x128xf32>
    tpu.vector_store %arg8[%c0_15, %c0_16], %43 {strides = array<i32>} : memref<2x128xf32, #tpu.memory_space<vmem>>, vector<2x128xf32>,
    %c0_i32_17 = arith.constant 0 : i32
    %45 = arith.cmpi eq, %arg1, %c0_i32_17 : i32
    %46 = arith.extui %45 : i1 to i32
    %c0_i32_18 = arith.constant 0 : i32
    %47 = arith.cmpi ne, %46, %c0_i32_18 : i32
    scf.if %47 {
      %c0_19 = arith.constant 0 : index
      %c0_20 = arith.constant 0 : index
      %48 = vector.load %arg8[%c0_19, %c0_20] : memref<2x128xf32, #tpu.memory_space<vmem>>, vector<2x128xf32>
      %cst_21 = arith.constant -1.000000e+30 : f32
      %49 = vector.broadcast %cst_21 : f32 to vector<2x128xf32>
      %50 = arith.select %19, %48, %49 : vector<2x128xi1>, vector<2x128xf32>
      %cst_22 = arith.constant dense<0xFF800000> : vector<2xf32>
      %51 = vector.multi_reduction <maximumf>, %50, %cst_22 [1] : vector<2x128xf32> to vector<2xf32>
      %52 = vector.shape_cast %51 : vector<2xf32> to vector<2x1xf32>
      %53 = vector.broadcast %52 : vector<2x1xf32> to vector<2x128xf32>
      %54 = arith.subf %50, %53 : vector<2x128xf32>
      %55 = math.exp %54 : vector<2x128xf32>
      %cst_23 = arith.constant dense<0.000000e+00> : vector<2xf32>
      %56 = vector.multi_reduction <add>, %55, %cst_23 [1] : vector<2x128xf32> to vector<2xf32>
      %57 = vector.shape_cast %56 : vector<2xf32> to vector<2x1xf32>
      %58 = math.log %57 : vector<2x1xf32>
      %59 = arith.addf %52, %58 : vector<2x1xf32>
      %cst_24 = arith.constant 0.000000e+00 : f32
      %60 = vector.broadcast %cst_24 : f32 to vector<2x1xf32>
      %61 = arith.subf %60, %59 : vector<2x1xf32>
      %62 = vector.shape_cast %61 : vector<2x1xf32> to vector<2x1x1xf32>
      %63 = vector.shape_cast %62 : vector<2x1x1xf32> to vector<2x1x1xf32>
      %64 = vector.broadcast %63 : vector<2x1x1xf32> to vector<2x1x128xf32>
      %c0_25 = arith.constant 0 : index
      %c0_26 = arith.constant 0 : index
      %c0_27 = arith.constant 0 : index
      %65 = vector.load %arg7[%c0_25, %c0_26, %c0_27] : memref<2x1x128xf32, #tpu.memory_space<vmem>>, vector<2x1x128xf32>
      tpu.vector_store %arg7[%c0_25, %c0_26, %c0_27], %64 {strides = array<i32>} : memref<2x1x128xf32, #tpu.memory_space<vmem>>, vector<2x1x128xf32>,
    } else {
    }
    return
  }
  func.func @transform_0(%arg0: i32, %arg1: i32, %arg2: memref<2xi32, #tpu.memory_space<smem>>, %arg3: memref<2xi32, #tpu.memory_space<smem>>) -> (i32, i32, i32) {
    %0 = arith.index_cast %arg0 : i32 to index
    %1 = memref.load %arg3[%0] : memref<2xi32, #tpu.memory_space<smem>>
    %2 = arith.minsi %arg1, %1 : i32
    %c0_i32 = arith.constant 0 : i32
    %c0_i32_0 = arith.constant 0 : i32
    return %arg0, %2, %c0_i32 : i32, i32, i32
  }
  func.func @transform_1(%arg0: i32, %arg1: i32, %arg2: memref<2xi32, #tpu.memory_space<smem>>, %arg3: memref<2xi32, #tpu.memory_space<smem>>) -> (i32, i32, i32) {
    %c0_i32 = arith.constant 0 : i32
    %c0_i32_0 = arith.constant 0 : i32
    %c0_i32_1 = arith.constant 0 : i32
    return %arg0, %c0_i32, %c0_i32_0 : i32, i32, i32
  }
  func.func @transform_2(%arg0: i32, %arg1: i32, %arg2: memref<2xi32, #tpu.memory_space<smem>>, %arg3: memref<2xi32, #tpu.memory_space<smem>>) -> (i32, i32, i32) {
    %c0_i32 = arith.constant 0 : i32
    %c0_i32_0 = arith.constant 0 : i32
    %c0_i32_1 = arith.constant 0 : i32
    return %arg0, %c0_i32, %c0_i32_0 : i32, i32, i32
  }
  func.func @transform_3(%arg0: i32, %arg1: i32, %arg2: memref<2xi32, #tpu.memory_space<smem>>, %arg3: memref<2xi32, #tpu.memory_space<smem>>) -> (i32, i32, i32) {
    %c0_i32 = arith.constant 0 : i32
    %c0_i32_0 = arith.constant 0 : i32
    %c0_i32_1 = arith.constant 0 : i32
    return %arg0, %c0_i32, %c0_i32_0 : i32, i32, i32
  }
}

</mosaic_0001>

<llo_original>
// kernel: _ctc_loss_impl.1
$region0: #{_ctc_loss_impl.1}
  #allocation0 [shape = 'u32[]', space=smem, size = 0x4, offset = 0x4, fixed_abs, tag = 'smem constant byte address 0x4 - core index']
  #allocation1 [shape = 'u32[144,128]{1,0:T(1,128)}', space=vmem, size = 0x12000, scoped, tag = 'internal scratch']
  #allocation2 [shape = 'f32[2,128]{1,0:T(2,128)}', space=vmem, size = 0x400, scoped, tag = 'scratch operand']
  #allocation3 [shape = 'f32[16,2,128]{2,1,0:T(2,128)}', space=vmem, size = 0x4000, scoped, tag = 'scratch operand']
  #allocation4 [shape = 'bf16[2,128,128]{2,1,0:T(8,128)(2,1)}', space=vmem, size = 0x10000, scoped, tag = 'scratch operand']
  #allocation5 [shape = 's32[1]{0}', space=sflag, size = 0x4, scoped, tag = 'scoped memory for _ctc_loss_impl.1']
  #allocation6 [shape = 'u8[512]{0}', space=smem, size = 0x200, scoped, tag = 'prefetched SMEM operand 0']
  #allocation7 [shape = 'u8[512]{0}', space=smem, size = 0x200, scoped, tag = 'prefetched SMEM operand 1']
  %s0 = inlined_call_operand.vmem [shape: s32[2], index: 0, kind: input, shape index: {}]
  %s1 = inlined_call_operand.vmem [shape: s32[2], index: 1, kind: input, shape index: {}]
  %s2 = inlined_call_operand.vmem [shape: f32[4,16,128], index: 2, kind: input, shape index: {}]
  %s3 = inlined_call_operand.vmem [shape: s32[4,1,128], index: 3, kind: input, shape index: {}]
  %s4 = inlined_call_operand.vmem [shape: f32[4,8,128], index: 4, kind: input, shape index: {}]
  %s5 = inlined_call_operand.vmem [shape: f32[4,1,128], index: 5, kind: output, shape index: {}]
  %s6 = sld [smem:[#allocation0]]
  $region68: #{_ctc_loss_impl.1} parent=0
    _
  %s8 = ssub.s32 1, %s6
  %s9 = scalar_select 0, %s8, %s6
  %s10 = sshll.u32 %s0, 4
  %s11 = int_to_ptr.vmem [resolvable:$true] %s10
  %13 = dma.vmem_to_smem %s11, 16, [#allocation6], [#allocation5]
  %s14 = sshll.u32 %s1, 4
  %s15 = int_to_ptr.vmem [resolvable:$true] %s14
  %17 = dma.vmem_to_smem %s15, 16, [#allocation7], [#allocation5]
  %18 = dma.done [#allocation5], 32
  %19 = sfence
  loop: start=0, step=1, limit=4
  $region2: #{_ctc_loss_impl.1} parent=0 // loop_pre_header
    _
  $region3: #{_ctc_loss_impl.1} parent=0 // loop_header
    %s21 = sphi 0, %s25
    %p22 = scmp.ge.s32.totalorder %s21, 4
    %s28 = sphi 0, %s40
    %s29 = sphi 0, %s36
    %s30 = sphi 0, %s28
    %s31 = sphi 0, %s29
    %s32 = sphi 0, %s30
    %s33 = sphi 0, %s31
    %s51 = sphi 0, %s53
    %s54 = sphi 0, %s51
    %s55 = sphi 0, %s54
    %s71 = sphi 0, %s55
    %s77 = sphi 0, %s79
    %s80 = sphi 0, %s77
    %s81 = sphi 0, %s80
    %s97 = sphi 0, %s81
    %s103 = sphi 0, %s105
    %s106 = sphi 0, %s103
    %s107 = sphi 0, %s106
    %s123 = sphi 0, %s107
    %s129 = sphi 0, %s131
    %s132 = sphi 0, %s129
    %s133 = sphi 0, %s132
    %s149 = sphi 0, %s133
  $region4: #{_ctc_loss_impl.1} parent=0 // loop_header_branch
    %24 = sbr.rel (%p22) target = $region8
  $region5: #{_ctc_loss_impl.1} parent=0 // loop_body
    %s26 = ssub.s32 %s21, 1
    %s27 = ssub.s32 %s21, 2
    %s34 = sadd.s32 1, %s29
    %p35 = scmp.ge.s32.totalorder %s34, 1
    %s36 = scalar_select %p35, 0, %s34
    %s37 = sadd.s32 1, %s28
    %s38 = scalar_select %p35, %s37, %s28
    %p39 = scmp.ge.s32.totalorder %s38, 2
    %s40 = scalar_select %p39, 0, %s38
    %s41 = sld [smem:[#allocation7 + %s28]]
    %p42 = scmp.lt.s32.totalorder %s29, %s41
    %s43 = scalar_select %p42, %s29, %s41
    %s44 = sld [smem:[#allocation7 + %s40]]
    %p45 = scmp.lt.s32.totalorder %s36, %s44
    %s46 = scalar_select %p45, %s36, %s44
    %s47 = ssub.s32 %s28, %s40
    %s48 = ssub.s32 %s43, %s46
    %s49 = sor.u32 %s47, %s48
    %p50 = scmp.eq.s32.totalorder %s49, 0
    %s52 = sadd.s32 %s51, 1
    %s53 = scalar_select %p50, %s51, %s52
    %p56 = pneg %p50
    %p57 = scmp.eq.s32.totalorder %s21, 1
    %p58 = por %p56, %p57
    %p59 = scmp.ne.s32.totalorder %s51, %s54
    %p60 = scmp.eq.s32.totalorder %s21, 0
    %p61 = por %p59, %p60
    %p62 = scmp.ne.s32.totalorder %s51, %s54
    %p63 = scmp.eq.s32.totalorder %s26, 1
    %p64 = por %p62, %p63
    %p65 = scmp.ne.s32.totalorder %s54, %s55
    %p66 = scmp.eq.s32.totalorder %s26, 0
    %p67 = por %p65, %p66
    %p68 = scmp.ne.s32.totalorder %s54, %s55
    %p69 = scmp.eq.s32.totalorder %s27, 1
    %p70 = por %p68, %p69
    %p72 = scmp.ne.s32.totalorder %s55, %s71
    %p73 = scmp.eq.s32.totalorder %s27, 0
    %p74 = por %p72, %p73
    %s75 = ssub.s32 %s28, %s40
    %p76 = scmp.eq.s32.totalorder %s75, 0
    %s78 = sadd.s32 %s77, 1
    %s79 = scalar_select %p76, %s77, %s78
    %p82 = pneg %p76
    %p83 = scmp.eq.s32.totalorder %s21, 1
    %p84 = por %p82, %p83
    %p85 = scmp.ne.s32.totalorder %s77, %s80
    %p86 = scmp.eq.s32.totalorder %s21, 0
    %p87 = por %p85, %p86
    %p88 = scmp.ne.s32.totalorder %s77, %s80
    %p89 = scmp.eq.s32.totalorder %s26, 1
    %p90 = por %p88, %p89
    %p91 = scmp.ne.s32.totalorder %s80, %s81
    %p92 = scmp.eq.s32.totalorder %s26, 0
    %p93 = por %p91, %p92
    %p94 = scmp.ne.s32.totalorder %s80, %s81
    %p95 = scmp.eq.s32.totalorder %s27, 1
    %p96 = por %p94, %p95
    %p98 = scmp.ne.s32.totalorder %s81, %s97
    %p99 = scmp.eq.s32.totalorder %s27, 0
    %p100 = por %p98, %p99
    %s101 = ssub.s32 %s28, %s40
    %p102 = scmp.eq.s32.totalorder %s101, 0
    %s104 = sadd.s32 %s103, 1
    %s105 = scalar_select %p102, %s103, %s104
    %p108 = pneg %p102
    %p109 = scmp.eq.s32.totalorder %s21, 1
    %p110 = por %p108, %p109
    %p111 = scmp.ne.s32.totalorder %s103, %s106
    %p112 = scmp.eq.s32.totalorder %s21, 0
    %p113 = por %p111, %p112
    %p114 = scmp.ne.s32.totalorder %s103, %s106
    %p115 = scmp.eq.s32.totalorder %s26, 1
    %p116 = por %p114, %p115
    %p117 = scmp.ne.s32.totalorder %s106, %s107
    %p118 = scmp.eq.s32.totalorder %s26, 0
    %p119 = por %p117, %p118
    %p120 = scmp.ne.s32.totalorder %s106, %s107
    %p121 = scmp.eq.s32.totalorder %s27, 1
    %p122 = por %p120, %p121
    %p124 = scmp.ne.s32.totalorder %s107, %s123
    %p125 = scmp.eq.s32.totalorder %s27, 0
    %p126 = por %p124, %p125
    %s127 = ssub.s32 %s28, %s40
    %p128 = scmp.eq.s32.totalorder %s127, 0
    %s130 = sadd.s32 %s129, 1
    %s131 = scalar_select %p128, %s129, %s130
    %p134 = pneg %p128
    %p135 = scmp.eq.s32.totalorder %s21, 1
    %p136 = por %p134, %p135
    %p137 = scmp.ne.s32.totalorder %s129, %s132
    %p138 = scmp.eq.s32.totalorder %s21, 0
    %p139 = por %p137, %p138
    %p140 = scmp.ne.s32.totalorder %s129, %s132
    %p141 = scmp.eq.s32.totalorder %s26, 1
    %p142 = por %p140, %p141
    %p143 = scmp.ne.s32.totalorder %s132, %s133
    %p144 = scmp.eq.s32.totalorder %s26, 0
    %p145 = por %p143, %p144
    %p146 = scmp.ne.s32.totalorder %s132, %s133
    %p147 = scmp.eq.s32.totalorder %s27, 1
    %p148 = por %p146, %p147
    %p150 = scmp.ne.s32.totalorder %s133, %s149
    %p151 = scmp.eq.s32.totalorder %s27, 0
    %p152 = por %p150, %p151
    %p153 = scmp.le.s32.totalorder 1, %s21
    %p154 = scmp.lt.s32.totalorder %s21, 3
    %p155 = pnand %p153, %p154
    %p156 = pneg %p155
    // Predicated region
    $region9: #{_ctc_loss_impl.1} parent=5 // pred_check
      _
    $region10: #{_ctc_loss_impl.1} parent=5 // pred_check_branch
      %158 = sbr.rel (%p155) target = $region12
    $region11: #{_ctc_loss_impl.1} parent=5 // pred_region
      %s159 = ssub.s32 %s21, 1
    $region12: #{_ctc_loss_impl.1} parent=5 // pred_fallthru
      _
    %p160 = scmp.lt.s32.totalorder %s21, 2
    // Predicated region
    $region13: #{_ctc_loss_impl.1} parent=5 // pred_check
      %p161 = pneg %p160
    $region14: #{_ctc_loss_impl.1} parent=5 // pred_check_branch
      %163 = sbr.rel (%p161) target = $region16
    $region15: #{_ctc_loss_impl.1} parent=5 // pred_region
      // Predicated region
      $region17: #{_ctc_loss_impl.1} parent=15 // pred_check
        %p164 = pneg %p61
      $region18: #{_ctc_loss_impl.1} parent=15 // pred_check_branch
        %166 = sbr.rel (%p164) target = $region20
      $region19: #{_ctc_loss_impl.1} parent=15 // pred_region
        %s167 = sld [smem:[#allocation7 + %s28]]
        %p168 = scmp.lt.s32.totalorder %s29, %s167
        %s169 = scalar_select %p168, %s29, %s167
        %s170 = smul.u32 2, %s28
        %s171 = smul.u32 2, %s169
        %p172 = scmp.lt.s32.totalorder %s170, 3
        %s173 = scalar_select %p172, %s170, 3
        %p174 = scmp.lt.s32.totalorder %s171, 1
        %s175 = scalar_select %p174, %s171, 1
        %s176 = smul.addr %s173, 2
        %s177 = sadd.s32 %s175, %s176
        %s178 = smul.addr %s177, 8
        %s179 = scalar_lea.vmem %s2, %s178
        %s180 = sld [smem:[#allocation7 + %s28]]
        %p181 = scmp.lt.s32.totalorder %s29, %s180
        %s182 = scalar_select %p181, %s29, %s180
        %s183 = smul.u32 2, %s28
        %s184 = smul.u32 2, %s182
      $region20: #{_ctc_loss_impl.1} parent=15 // pred_fallthru
        _
      // Predicated region
      $region21: #{_ctc_loss_impl.1} parent=15 // pred_check
        %p185 = pneg %p87
      $region22: #{_ctc_loss_impl.1} parent=15 // pred_check_branch
        %187 = sbr.rel (%p185) target = $region24
      $region23: #{_ctc_loss_impl.1} parent=15 // pred_region
        %s188 = smul.u32 2, %s28
        %p189 = scmp.lt.s32.totalorder %s188, 3
        %s190 = scalar_select %p189, %s188, 3
        %s191 = scalar_lea.vmem %s3, %s190
        %s192 = smul.u32 2, %s28
      $region24: #{_ctc_loss_impl.1} parent=15 // pred_fallthru
        _
      // Predicated region
      $region25: #{_ctc_loss_impl.1} parent=15 // pred_check
        %p193 = pneg %p113
      $region26: #{_ctc_loss_impl.1} parent=15 // pred_check_branch
        %195 = sbr.rel (%p193) target = $region28
      $region27: #{_ctc_loss_impl.1} parent=15 // pred_region
        %s196 = smul.u32 2, %s28
        %p197 = scmp.lt.s32.totalorder %s196, 3
        %s198 = scalar_select %p197, %s196, 3
        %s199 = smul.addr %s198, 8
        %s200 = scalar_lea.vmem %s4, %s199
        %s201 = smul.u32 2, %s28
      $region28: #{_ctc_loss_impl.1} parent=15 // pred_fallthru
        _
    $region16: #{_ctc_loss_impl.1} parent=5 // pred_fallthru
      _
    %p202 = scmp.le.s32.totalorder 1, %s21
    %p203 = scmp.lt.s32.totalorder %s21, 3
    %p204 = pnand %p202, %p203
    %p205 = pneg %p204
    // Predicated region
    $region29: #{_ctc_loss_impl.1} parent=5 // pred_check
      _
    $region30: #{_ctc_loss_impl.1} parent=5 // pred_check_branch
      %207 = sbr.rel (%p204) target = $region32
    $region31: #{_ctc_loss_impl.1} parent=5 // pred_region
      %s208 = ssub.s32 %s21, 1
      %s209 = sld [smem:[#allocation7 + %s30]]
      %p210 = scmp.lt.s32.totalorder %s31, %s209
      %s211 = scalar_select %p210, %s31, %s209
      %s212 = smul.u32 2, %s30
      %s213 = smul.u32 2, %s211
      %p214 = scmp.lt.s32.totalorder %s212, 3
      %s215 = scalar_select %p214, %s212, 3
      %p216 = scmp.lt.s32.totalorder %s213, 1
      %s217 = scalar_select %p216, %s213, 1
      %s218 = smul.addr %s215, 2
      %s219 = sadd.s32 %s217, %s218
      %s220 = smul.addr %s219, 8
      %s221 = scalar_lea.vmem %s2, %s220
      %p222 = pneg %p67
      %p223 = pneg %p64
      %s224 = smul.u32 2, %s30
      %p225 = scmp.lt.s32.totalorder %s224, 3
      %s226 = scalar_select %p225, %s224, 3
      %s227 = scalar_lea.vmem %s3, %s226
      %p228 = pneg %p93
      %p229 = pneg %p90
      %s230 = smul.u32 2, %s30
      %p231 = scmp.lt.s32.totalorder %s230, 3
      %s232 = scalar_select %p231, %s230, 3
      %s233 = smul.addr %s232, 8
      %s234 = scalar_lea.vmem %s4, %s233
      %p235 = pneg %p119
      %p236 = pneg %p116
      %p237 = pneg %p145
      %p238 = pneg %p142
      %s239 = smul.u32 2, %s30
      %p240 = scmp.lt.s32.totalorder %s239, 3
      %s241 = scalar_select %p240, %s239, 3
      %s242 = scalar_lea.vmem %s5, %s241
      %s243 = sld [smem:[#allocation7 + %s30]]
      %p244 = scmp.lt.s32.totalorder %s31, %s243
      %s245 = scalar_select %p244, %s31, %s243
      %s246 = smul.u32 2, %s30
      %s247 = smul.u32 2, %s245
      %p248 = scmp.lt.s32.totalorder %s246, 3
      %s249 = scalar_select %p248, %s246, 3
      %p250 = scmp.lt.s32.totalorder %s247, 1
      %s251 = scalar_select %p250, %s247, 1
      %s252 = smul.addr %s249, 2
      %s253 = sadd.s32 %s251, %s252
      %s254 = smul.addr %s253, 8
      %s255 = scalar_lea.vmem %s2, %s254
      %s256 = sld [smem:[#allocation7 + %s30]]
      %p257 = scmp.lt.s32.totalorder %s31, %s256
      %s258 = scalar_select %p257, %s31, %s256
      %s259 = smul.u32 2, %s30
      %s260 = smul.u32 2, %s258
      %s261 = smul.u32 2, %s30
      %p262 = scmp.lt.s32.totalorder %s261, 3
      %s263 = scalar_select %p262, %s261, 3
      %s264 = scalar_lea.vmem %s3, %s263
      %s265 = smul.u32 2, %s30
      %s266 = smul.u32 2, %s30
      %p267 = scmp.lt.s32.totalorder %s266, 3
      %s268 = scalar_select %p267, %s266, 3
      %s269 = smul.addr %s268, 8
      %s270 = scalar_lea.vmem %s4, %s269
      %s271 = smul.u32 2, %s30
      %s272 = smul.u32 2, %s30
      %p273 = scmp.lt.s32.totalorder %s272, 3
      %s274 = scalar_select %p273, %s272, 3
      %s275 = scalar_lea.vmem %s5, %s274
      %s276 = smul.u32 2, %s30
      %s278 = sld [smem:[#allocation6 + %s30]]
      %s279 = smul.u32 %s31, 16
      %v280 = vld [vmem:[%s270] sm:$0xff]
      %v281 = vld [vmem:[%s270 + $0x8] sm:$0xff]
      %vm282 = vcmp.gt.f32.partialorder %v280, 0.5
      %vm283 = vcmp.gt.f32.partialorder %v281, 0.5
      %p284 = scmp.eq.s32.totalorder %s31, 0
      // Predicated region
      $region33: #{_ctc_loss_impl.1} parent=31 // pred_check
        %p285 = pneg %p284
      $region34: #{_ctc_loss_impl.1} parent=31 // pred_check_branch
        %287 = sbr.rel (%p285) target = $region36
      $region35: #{_ctc_loss_impl.1} parent=31 // pred_region
        %v288 = vld [vmem:[%s264] sm:$0x1]
        %v289 = vld [vmem:[%s264 + $0x1] sm:$0x1]
        %v290 = vlaneseq
        %v291 = vshrl.u32 %v290, 7
        %v292 = vadd.s32 %v291, 8
        %v293 = vadd.s32 %v291, 16
        %v294 = vadd.s32 %v291, 24
        %v295 = vadd.s32 %v291, 32
        %v296 = vadd.s32 %v291, 40
        %v297 = vadd.s32 %v291, 48
        %v298 = vadd.s32 %v291, 56
        %v299 = vadd.s32 %v291, 64
        %v300 = vadd.s32 %v291, 72
        %v301 = vadd.s32 %v291, 80
        %v302 = vadd.s32 %v291, 88
        %v303 = vadd.s32 %v291, 96
        %v304 = vadd.s32 %v291, 104
        %v305 = vadd.s32 %v291, 112
        %v306 = vadd.s32 %v291, 120
        %v307 = vlaneseq
        %v308 = vshrl.u32 %v307, 7
        %v309 = vsub.s32 0, %v308
        %v310 = vrot.slane %v288, %v309
        %vm311 = vcmp.eq.s32.totalorder %v291, %v310
        %vm312 = vcmp.eq.s32.totalorder %v292, %v310
        %vm313 = vcmp.eq.s32.totalorder %v293, %v310
        %vm314 = vcmp.eq.s32.totalorder %v294, %v310
        %vm315 = vcmp.eq.s32.totalorder %v295, %v310
        %vm316 = vcmp.eq.s32.totalorder %v296, %v310
        %vm317 = vcmp.eq.s32.totalorder %v297, %v310
        %vm318 = vcmp.eq.s32.totalorder %v298, %v310
        %vm319 = vcmp.eq.s32.totalorder %v299, %v310
        %vm320 = vcmp.eq.s32.totalorder %v300, %v310
        %vm321 = vcmp.eq.s32.totalorder %v301, %v310
        %vm322 = vcmp.eq.s32.totalorder %v302, %v310
        %vm323 = vcmp.eq.s32.totalorder %v303, %v310
        %vm324 = vcmp.eq.s32.totalorder %v304, %v310
        %vm325 = vcmp.eq.s32.totalorder %v305, %v310
        %vm326 = vcmp.eq.s32.totalorder %v306, %v310
        %v327 = vsel %vm311, 1, 0
        %v328 = vsel %vm312, 1, 0
        %v329 = vsel %vm313, 1, 0
        %v330 = vsel %vm314, 1, 0
        %v331 = vsel %vm315, 1, 0
        %v332 = vsel %vm316, 1, 0
        %v333 = vsel %vm317, 1, 0
        %v334 = vsel %vm318, 1, 0
        %v335 = vsel %vm319, 1, 0
        %v336 = vsel %vm320, 1, 0
        %v337 = vsel %vm321, 1, 0
        %v338 = vsel %vm322, 1, 0
        %v339 = vsel %vm323, 1, 0
        %v340 = vsel %vm324, 1, 0
        %v341 = vsel %vm325, 1, 0
        %v342 = vsel %vm326, 1, 0
        %v343 = vcvt.s32.f32 %v327
        %v344 = vcvt.s32.f32 %v328
        %v345 = vcvt.s32.f32 %v329
        %v346 = vcvt.s32.f32 %v330
        %v347 = vcvt.s32.f32 %v331
        %v348 = vcvt.s32.f32 %v332
        %v349 = vcvt.s32.f32 %v333
        %v350 = vcvt.s32.f32 %v334
        %v351 = vcvt.s32.f32 %v335
        %v352 = vcvt.s32.f32 %v336
        %v353 = vcvt.s32.f32 %v337
        %v354 = vcvt.s32.f32 %v338
        %v355 = vcvt.s32.f32 %v339
        %v356 = vcvt.s32.f32 %v340
        %v357 = vcvt.s32.f32 %v341
        %v358 = vcvt.s32.f32 %v342
        %v359 = vpack.c.bf16 %v344, %v343
        %v360 = vpack.c.bf16 %v346, %v345
        %v361 = vpack.c.bf16 %v348, %v347
        %v362 = vpack.c.bf16 %v350, %v349
        %v363 = vpack.c.bf16 %v352, %v351
        %v364 = vpack.c.bf16 %v354, %v353
        %v365 = vpack.c.bf16 %v356, %v355
        %v366 = vpack.c.bf16 %v358, %v357
        %v375 = vunpack.c.l.b16 %v359
        %v376 = vunpack.c.h.b16 %v359
        %v377 = vunpack.c.l.b16 %v360
        %v378 = vunpack.c.h.b16 %v360
        %v379 = vunpack.c.l.b16 %v361
        %v380 = vunpack.c.h.b16 %v361
        %v381 = vunpack.c.l.b16 %v362
        %v382 = vunpack.c.h.b16 %v362
        %v383 = vunpack.c.l.b16 %v363
        %v384 = vunpack.c.h.b16 %v363
        %v385 = vunpack.c.l.b16 %v364
        %v386 = vunpack.c.h.b16 %v364
        %v387 = vunpack.c.l.b16 %v365
        %v388 = vunpack.c.h.b16 %v365
        %v389 = vunpack.c.l.b16 %v366
        %v390 = vunpack.c.h.b16 %v366
        %v391 = vpack.c.b16 %v375, %v375
        %v392 = vpack.c.b16 %v376, %v376
        %v393 = vpack.c.b16 %v377, %v377
        %v394 = vpack.c.b16 %v378, %v378
        %v395 = vpack.c.b16 %v379, %v379
        %v396 = vpack.c.b16 %v380, %v380
        %v397 = vpack.c.b16 %v381, %v381
        %v398 = vpack.c.b16 %v382, %v382
        %v399 = vpack.c.b16 %v383, %v383
        %v400 = vpack.c.b16 %v384, %v384
        %v401 = vpack.c.b16 %v385, %v385
        %v402 = vpack.c.b16 %v386, %v386
        %v403 = vpack.c.b16 %v387, %v387
        %v404 = vpack.c.b16 %v388, %v388
        %v405 = vpack.c.b16 %v389, %v389
        %v406 = vpack.c.b16 %v390, %v390
        %423 = vst [vmem:[#allocation4] sm:$0xf] %v391
        %424 = vst [vmem:[#allocation4 + $0x4] sm:$0xf] %v392
        %425 = vst [vmem:[#allocation4 + $0x8] sm:$0xf] %v393
        %426 = vst [vmem:[#allocation4 + $0xc] sm:$0xf] %v394
        %427 = vst [vmem:[#allocation4 + $0x10] sm:$0xf] %v395
        %428 = vst [vmem:[#allocation4 + $0x14] sm:$0xf] %v396
        %429 = vst [vmem:[#allocation4 + $0x18] sm:$0xf] %v397
        %430 = vst [vmem:[#allocation4 + $0x1c] sm:$0xf] %v398
        %431 = vst [vmem:[#allocation4 + $0x20] sm:$0xf] %v399
        %432 = vst [vmem:[#allocation4 + $0x24] sm:$0xf] %v400
        %433 = vst [vmem:[#allocation4 + $0x28] sm:$0xf] %v401
        %434 = vst [vmem:[#allocation4 + $0x2c] sm:$0xf] %v402
        %435 = vst [vmem:[#allocation4 + $0x30] sm:$0xf] %v403
        %436 = vst [vmem:[#allocation4 + $0x34] sm:$0xf] %v404
        %437 = vst [vmem:[#allocation4 + $0x38] sm:$0xf] %v405
        %438 = vst [vmem:[#allocation4 + $0x3c] sm:$0xf] %v406
        %v439 = vlaneseq
        %v440 = vshrl.u32 %v439, 7
        %v441 = vsub.s32 0, %v440
        %v442 = vrot.slane %v289, %v441
        %vm443 = vcmp.eq.s32.totalorder %v291, %v442
        %vm444 = vcmp.eq.s32.totalorder %v292, %v442
        %vm445 = vcmp.eq.s32.totalorder %v293, %v442
        %vm446 = vcmp.eq.s32.totalorder %v294, %v442
        %vm447 = vcmp.eq.s32.totalorder %v295, %v442
        %vm448 = vcmp.eq.s32.totalorder %v296, %v442
        %vm449 = vcmp.eq.s32.totalorder %v297, %v442
        %vm450 = vcmp.eq.s32.totalorder %v298, %v442
        %vm451 = vcmp.eq.s32.totalorder %v299, %v442
        %vm452 = vcmp.eq.s32.totalorder %v300, %v442
        %vm453 = vcmp.eq.s32.totalorder %v301, %v442
        %vm454 = vcmp.eq.s32.totalorder %v302, %v442
        %vm455 = vcmp.eq.s32.totalorder %v303, %v442
        %vm456 = vcmp.eq.s32.totalorder %v304, %v442
        %vm457 = vcmp.eq.s32.totalorder %v305, %v442
        %vm458 = vcmp.eq.s32.totalorder %v306, %v442
        %v459 = vsel %vm443, 1, 0
        %v460 = vsel %vm444, 1, 0
        %v461 = vsel %vm445, 1, 0
        %v462 = vsel %vm446, 1, 0
        %v463 = vsel %vm447, 1, 0
        %v464 = vsel %vm448, 1, 0
        %v465 = vsel %vm449, 1, 0
        %v466 = vsel %vm450, 1, 0
        %v467 = vsel %vm451, 1, 0
        %v468 = vsel %vm452, 1, 0
        %v469 = vsel %vm453, 1, 0
        %v470 = vsel %vm454, 1, 0
        %v471 = vsel %vm455, 1, 0
        %v472 = vsel %vm456, 1, 0
        %v473 = vsel %vm457, 1, 0
        %v474 = vsel %vm458, 1, 0
        %v475 = vcvt.s32.f32 %v459
        %v476 = vcvt.s32.f32 %v460
        %v477 = vcvt.s32.f32 %v461
        %v478 = vcvt.s32.f32 %v462
        %v479 = vcvt.s32.f32 %v463
        %v480 = vcvt.s32.f32 %v464
        %v481 = vcvt.s32.f32 %v465
        %v482 = vcvt.s32.f32 %v466
        %v483 = vcvt.s32.f32 %v467
        %v484 = vcvt.s32.f32 %v468
        %v485 = vcvt.s32.f32 %v469
        %v486 = vcvt.s32.f32 %v470
        %v487 = vcvt.s32.f32 %v471
        %v488 = vcvt.s32.f32 %v472
        %v489 = vcvt.s32.f32 %v473
        %v490 = vcvt.s32.f32 %v474
        %v491 = vpack.c.bf16 %v476, %v475
        %v492 = vpack.c.bf16 %v478, %v477
        %v493 = vpack.c.bf16 %v480, %v479
        %v494 = vpack.c.bf16 %v482, %v481
        %v495 = vpack.c.bf16 %v484, %v483
        %v496 = vpack.c.bf16 %v486, %v485
        %v497 = vpack.c.bf16 %v488, %v487
        %v498 = vpack.c.bf16 %v490, %v489
        %v507 = vunpack.c.l.b16 %v491
        %v508 = vunpack.c.h.b16 %v491
        %v509 = vunpack.c.l.b16 %v492
        %v510 = vunpack.c.h.b16 %v492
        %v511 = vunpack.c.l.b16 %v493
        %v512 = vunpack.c.h.b16 %v493
        %v513 = vunpack.c.l.b16 %v494
        %v514 = vunpack.c.h.b16 %v494
        %v515 = vunpack.c.l.b16 %v495
        %v516 = vunpack.c.h.b16 %v495
        %v517 = vunpack.c.l.b16 %v496
        %v518 = vunpack.c.h.b16 %v496
        %v519 = vunpack.c.l.b16 %v497
        %v520 = vunpack.c.h.b16 %v497
        %v521 = vunpack.c.l.b16 %v498
        %v522 = vunpack.c.h.b16 %v498
        %v523 = vpack.c.b16 %v507, %v507
        %v524 = vpack.c.b16 %v508, %v508
        %v525 = vpack.c.b16 %v509, %v509
        %v526 = vpack.c.b16 %v510, %v510
        %v527 = vpack.c.b16 %v511, %v511
        %v528 = vpack.c.b16 %v512, %v512
        %v529 = vpack.c.b16 %v513, %v513
        %v530 = vpack.c.b16 %v514, %v514
        %v531 = vpack.c.b16 %v515, %v515
        %v532 = vpack.c.b16 %v516, %v516
        %v533 = vpack.c.b16 %v517, %v517
        %v534 = vpack.c.b16 %v518, %v518
        %v535 = vpack.c.b16 %v519, %v519
        %v536 = vpack.c.b16 %v520, %v520
        %v537 = vpack.c.b16 %v521, %v521
        %v538 = vpack.c.b16 %v522, %v522
        %s555 = scalar_lea.vmem [#allocation4], 64
        %556 = vst [vmem:[%s555] sm:$0xf] %v523
        %557 = vst [vmem:[%s555 + $0x4] sm:$0xf] %v524
        %558 = vst [vmem:[%s555 + $0x8] sm:$0xf] %v525
        %559 = vst [vmem:[%s555 + $0xc] sm:$0xf] %v526
        %560 = vst [vmem:[%s555 + $0x10] sm:$0xf] %v527
        %561 = vst [vmem:[%s555 + $0x14] sm:$0xf] %v528
        %562 = vst [vmem:[%s555 + $0x18] sm:$0xf] %v529
        %563 = vst [vmem:[%s555 + $0x1c] sm:$0xf] %v530
        %564 = vst [vmem:[%s555 + $0x20] sm:$0xf] %v531
        %565 = vst [vmem:[%s555 + $0x24] sm:$0xf] %v532
        %566 = vst [vmem:[%s555 + $0x28] sm:$0xf] %v533
        %567 = vst [vmem:[%s555 + $0x2c] sm:$0xf] %v534
        %568 = vst [vmem:[%s555 + $0x30] sm:$0xf] %v535
        %569 = vst [vmem:[%s555 + $0x34] sm:$0xf] %v536
        %570 = vst [vmem:[%s555 + $0x38] sm:$0xf] %v537
        %571 = vst [vmem:[%s555 + $0x3c] sm:$0xf] %v538
      $region36: #{_ctc_loss_impl.1} parent=31 // pred_fallthru
        _
      %p572 = scmp.lt.s32.totalorder %s279, %s278
      // Predicated region
      $region37: #{_ctc_loss_impl.1} parent=31 // pred_check
        %p573 = pneg %p572
      $region38: #{_ctc_loss_impl.1} parent=31 // pred_check_branch
        %575 = sbr.rel (%p573) target = $region40
      $region39: #{_ctc_loss_impl.1} parent=31 // pred_region
        %v576 = vld [vmem:[%s255] sm:$0xff]
        %v577 = vld [vmem:[%s255 + $0x8] sm:$0xff]
        %v578 = vld [vmem:[%s255 + $0x10] sm:$0xff]
        %v579 = vld [vmem:[%s255 + $0x18] sm:$0xff]
        %v580 = vpack.c.bf16 %v577, %v576
        %v581 = vpack.c.bf16 %v579, %v578
        %v582 = vunpack.c.l.bf16 %v580
        %v583 = vunpack.c.h.bf16 %v580
        %v584 = vunpack.c.l.bf16 %v581
        %v585 = vunpack.c.h.bf16 %v581
        %v586 = vsub.f32 %v576, %v582
        %v587 = vsub.f32 %v577, %v583
        %v588 = vsub.f32 %v578, %v584
        %v589 = vsub.f32 %v579, %v585
        %v590 = vpack.c.bf16 %v587, %v586
        %v591 = vpack.c.bf16 %v589, %v588
        %v592 = vld [vmem:[#allocation4] sm:$0xf]
        %v593 = vld [vmem:[#allocation4 + $0x4] sm:$0xf]
        %v594 = vld [vmem:[#allocation4 + $0x8] sm:$0xf]
        %v595 = vld [vmem:[#allocation4 + $0xc] sm:$0xf]
        %v596 = vld [vmem:[#allocation4 + $0x10] sm:$0xf]
        %v597 = vld [vmem:[#allocation4 + $0x14] sm:$0xf]
        %v598 = vld [vmem:[#allocation4 + $0x18] sm:$0xf]
        %v599 = vld [vmem:[#allocation4 + $0x1c] sm:$0xf]
        %v600 = vld [vmem:[#allocation4 + $0x20] sm:$0xf]
        %v601 = vld [vmem:[#allocation4 + $0x24] sm:$0xf]
        %v602 = vld [vmem:[#allocation4 + $0x28] sm:$0xf]
        %v603 = vld [vmem:[#allocation4 + $0x2c] sm:$0xf]
        %v604 = vld [vmem:[#allocation4 + $0x30] sm:$0xf]
        %v605 = vld [vmem:[#allocation4 + $0x34] sm:$0xf]
        %v606 = vld [vmem:[#allocation4 + $0x38] sm:$0xf]
        %v607 = vld [vmem:[#allocation4 + $0x3c] sm:$0xf]
        %v624 = vunpack.c.l.b16 %v592
        %v625 = vunpack.c.l.b16 %v593
        %v626 = vunpack.c.l.b16 %v594
        %v627 = vunpack.c.l.b16 %v595
        %v628 = vunpack.c.l.b16 %v596
        %v629 = vunpack.c.l.b16 %v597
        %v630 = vunpack.c.l.b16 %v598
        %v631 = vunpack.c.l.b16 %v599
        %v632 = vunpack.c.l.b16 %v600
        %v633 = vunpack.c.l.b16 %v601
        %v634 = vunpack.c.l.b16 %v602
        %v635 = vunpack.c.l.b16 %v603
        %v636 = vunpack.c.l.b16 %v604
        %v637 = vunpack.c.l.b16 %v605
        %v638 = vunpack.c.l.b16 %v606
        %v639 = vunpack.c.l.b16 %v607
        %v640 = vpack.c.b16 %v625, %v624
        %v641 = vpack.c.b16 %v627, %v626
        %v642 = vpack.c.b16 %v629, %v628
        %v643 = vpack.c.b16 %v631, %v630
        %v644 = vpack.c.b16 %v633, %v632
        %v645 = vpack.c.b16 %v635, %v634
        %v646 = vpack.c.b16 %v637, %v636
        %v647 = vpack.c.b16 %v639, %v638
        %656 = vmatprep.subr.bf16.mxu0 0
        %657 = vmatpush1.bf16.msra.mxu0 %v647
        %658 = vmatprep.subr.bf16.mxu0 0
        %659 = vmatpush1.bf16.msra.mxu0 %v646
        %660 = vmatprep.subr.bf16.mxu0 0
        %661 = vmatpush1.bf16.msra.mxu0 %v645
        %662 = vmatprep.subr.bf16.mxu0 0
        %663 = vmatpush1.bf16.msra.mxu0 %v644
        %664 = vmatprep.subr.bf16.mxu0 0
        %665 = vmatpush1.bf16.msra.mxu0 %v643
        %666 = vmatprep.subr.bf16.mxu0 0
        %667 = vmatpush1.bf16.msra.mxu0 %v642
        %668 = vmatprep.subr.bf16.mxu0 0
        %669 = vmatpush1.bf16.msra.mxu0 %v641
        %670 = vmatprep.subr.bf16.mxu0 0
        %671 = vmatpush1.bf16.msra.mxu0 %v640
        %672 = vmatprep.subr.bf16.mxu0 0
        %673 = vmatpush2.bf16.msra.mxu0 0
        %674 = vmatprep.subr.bf16.mxu0 0
        %675 = vmatpush2.bf16.msra.mxu0 0
        %676 = vmatprep.subr.bf16.mxu0 0
        %677 = vmatpush2.bf16.msra.mxu0 0
        %678 = vmatprep.subr.bf16.mxu0 0
        %679 = vmatpush2.bf16.msra.mxu0 0
        %680 = vmatprep.subr.bf16.mxu0 0
        %681 = vmatpush2.bf16.msra.mxu0 0
        %682 = vmatprep.subr.bf16.mxu0 0
        %683 = vmatpush2.bf16.msra.mxu0 0
        %684 = vmatprep.subr.bf16.mxu0 0
        %685 = vmatpush2.bf16.msra.mxu0 0
        %686 = vmatprep.subr.bf16.mxu0 0
        %687 = vmatpush2.bf16.msra.mxu0 0
        %688 = vmatprep.mubr.bf16.mxu0 0
        %689 = vmatmul.mubr.bf16.gmra.mxu0 %v590
        %v690 = vpop.f32.mrf.mxu0
        %v691 = vadd.f32 0.0, %v690
        %v692 = vpop.f32.mrf.mxu0
        %v693 = vpop.f32.mrf.mxu0
        %v694 = vadd.f32 0.0, %v693
        %v695 = vpop.f32.mrf.mxu0
        %696 = vdwg.mxu0
        %697 = vmatprep.subr.bf16.mxu0 0
        %698 = vmatpush1.bf16.msra.mxu0 %v647
        %699 = vmatprep.subr.bf16.mxu0 0
        %700 = vmatpush1.bf16.msra.mxu0 %v646
        %701 = vmatprep.subr.bf16.mxu0 0
        %702 = vmatpush1.bf16.msra.mxu0 %v645
        %703 = vmatprep.subr.bf16.mxu0 0
        %704 = vmatpush1.bf16.msra.mxu0 %v644
        %705 = vmatprep.subr.bf16.mxu0 0
        %706 = vmatpush1.bf16.msra.mxu0 %v643
        %707 = vmatprep.subr.bf16.mxu0 0
        %708 = vmatpush1.bf16.msra.mxu0 %v642
        %709 = vmatprep.subr.bf16.mxu0 0
        %710 = vmatpush1.bf16.msra.mxu0 %v641
        %711 = vmatprep.subr.bf16.mxu0 0
        %712 = vmatpush1.bf16.msra.mxu0 %v640
        %713 = vmatprep.subr.bf16.mxu0 0
        %714 = vmatpush2.bf16.msra.mxu0 0
        %715 = vmatprep.subr.bf16.mxu0 0
        %716 = vmatpush2.bf16.msra.mxu0 0
        %717 = vmatprep.subr.bf16.mxu0 0
        %718 = vmatpush2.bf16.msra.mxu0 0
        %719 = vmatprep.subr.bf16.mxu0 0
        %720 = vmatpush2.bf16.msra.mxu0 0
        %721 = vmatprep.subr.bf16.mxu0 0
        %722 = vmatpush2.bf16.msra.mxu0 0
        %723 = vmatprep.subr.bf16.mxu0 0
        %724 = vmatpush2.bf16.msra.mxu0 0
        %725 = vmatprep.subr.bf16.mxu0 0
        %726 = vmatpush2.bf16.msra.mxu0 0
        %727 = vmatprep.subr.bf16.mxu0 0
        %728 = vmatpush2.bf16.msra.mxu0 0
        %729 = vmatprep.mubr.bf16.mxu0 0
        %730 = vmatmul.mubr.bf16.gmra.mxu0 %v580
        %v731 = vpop.f32.mrf.mxu0
        %v732 = vadd.f32 %v691, %v731
        %v733 = vpop.f32.mrf.mxu0
        %v734 = vpop.f32.mrf.mxu0
        %v735 = vadd.f32 %v694, %v734
        %v736 = vpop.f32.mrf.mxu0
        %737 = vdwg.mxu0
        %v740 = vcombine.high %v732, %v732
        %v742 = vunpack.c.l.s4 1966171168
        %v743 = vunpack.c.0.s8 %v742
        %v744 = vlaneseq
        %v745 = vshrl.u32 %v744, 7
        %v746 = vsub.s32 %v743, %v745
        %v747 = vrot.slane %v732, %v746
        %v749 = vunpack.c.l.s4 1966171168
        %v750 = vunpack.c.0.s8 %v749
        %v751 = vlaneseq
        %v752 = vshrl.u32 %v751, 7
        %v753 = vsub.s32 %v750, %v752
        %v754 = vrot.slane %v740, %v753
        %v755 = vcombine.high %v747, %v747
        %v756 = vcombine.high %v754, %v754
        %v758 = vunpack.c.l.s4 1966171168
        %v759 = vunpack.c.0.s8 %v758
        %v760 = vlaneseq
        %v761 = vshrl.u32 %v760, 7
        %v762 = vsub.s32 %v759, %v761
        %v763 = vrot.slane %v747, %v762
        %v765 = vunpack.c.l.s4 1966171168
        %v766 = vunpack.c.0.s8 %v765
        %v767 = vlaneseq
        %v768 = vshrl.u32 %v767, 7
        %v769 = vsub.s32 %v766, %v768
        %v770 = vrot.slane %v754, %v769
        %v772 = vunpack.c.l.s4 1966171168
        %v773 = vunpack.c.0.s8 %v772
        %v774 = vlaneseq
        %v775 = vshrl.u32 %v774, 7
        %v776 = vsub.s32 %v773, %v775
        %v777 = vrot.slane %v755, %v776
        %v779 = vunpack.c.l.s4 1966171168
        %v780 = vunpack.c.0.s8 %v779
        %v781 = vlaneseq
        %v782 = vshrl.u32 %v781, 7
        %v783 = vsub.s32 %v780, %v782
        %v784 = vrot.slane %v756, %v783
        %v785 = vcombine.high %v763, %v763
        %v786 = vcombine.high %v770, %v770
        %v787 = vcombine.high %v777, %v777
        %v788 = vcombine.high %v784, %v784
        %v789 = vcombine.high %v735, %v735
        %v791 = vunpack.c.l.s4 1966171168
        %v792 = vunpack.c.0.s8 %v791
        %v793 = vlaneseq
        %v794 = vshrl.u32 %v793, 7
        %v795 = vsub.s32 %v792, %v794
        %v796 = vrot.slane %v735, %v795
        %v798 = vunpack.c.l.s4 1966171168
        %v799 = vunpack.c.0.s8 %v798
        %v800 = vlaneseq
        %v801 = vshrl.u32 %v800, 7
        %v802 = vsub.s32 %v799, %v801
        %v803 = vrot.slane %v789, %v802
        %v804 = vcombine.high %v796, %v796
        %v805 = vcombine.high %v803, %v803
        %v807 = vunpack.c.l.s4 1966171168
        %v808 = vunpack.c.0.s8 %v807
        %v809 = vlaneseq
        %v810 = vshrl.u32 %v809, 7
        %v811 = vsub.s32 %v808, %v810
        %v812 = vrot.slane %v796, %v811
        %v814 = vunpack.c.l.s4 1966171168
        %v815 = vunpack.c.0.s8 %v814
        %v816 = vlaneseq
        %v817 = vshrl.u32 %v816, 7
        %v818 = vsub.s32 %v815, %v817
        %v819 = vrot.slane %v803, %v818
        %v821 = vunpack.c.l.s4 1966171168
        %v822 = vunpack.c.0.s8 %v821
        %v823 = vlaneseq
        %v824 = vshrl.u32 %v823, 7
        %v825 = vsub.s32 %v822, %v824
        %v826 = vrot.slane %v804, %v825
        %v828 = vunpack.c.l.s4 1966171168
        %v829 = vunpack.c.0.s8 %v828
        %v830 = vlaneseq
        %v831 = vshrl.u32 %v830, 7
        %v832 = vsub.s32 %v829, %v831
        %v833 = vrot.slane %v805, %v832
        %v834 = vcombine.high %v812, %v812
        %v835 = vcombine.high %v819, %v819
        %v836 = vcombine.high %v826, %v826
        %v837 = vcombine.high %v833, %v833
        %854 = vst [vmem:[#allocation3] sm:$0x1] %v763
        %855 = vst [vmem:[#allocation3 + $0x2] sm:$0x1] %v777
        %856 = vst [vmem:[#allocation3 + $0x4] sm:$0x1] %v785
        %857 = vst [vmem:[#allocation3 + $0x6] sm:$0x1] %v787
        %858 = vst [vmem:[#allocation3 + $0x8] sm:$0x1] %v770
        %859 = vst [vmem:[#allocation3 + $0xa] sm:$0x1] %v784
        %860 = vst [vmem:[#allocation3 + $0xc] sm:$0x1] %v786
        %861 = vst [vmem:[#allocation3 + $0xe] sm:$0x1] %v788
        %862 = vst [vmem:[#allocation3 + $0x10] sm:$0x1] %v812
        %863 = vst [vmem:[#allocation3 + $0x12] sm:$0x1] %v826
        %864 = vst [vmem:[#allocation3 + $0x14] sm:$0x1] %v834
        %865 = vst [vmem:[#allocation3 + $0x16] sm:$0x1] %v836
        %866 = vst [vmem:[#allocation3 + $0x18] sm:$0x1] %v819
        %867 = vst [vmem:[#allocation3 + $0x1a] sm:$0x1] %v833
        %868 = vst [vmem:[#allocation3 + $0x1c] sm:$0x1] %v835
        %869 = vst [vmem:[#allocation3 + $0x1e] sm:$0x1] %v837
        %s870 = scalar_lea.vmem [#allocation4], 64
        %v871 = vld [vmem:[%s870] sm:$0xf]
        %v872 = vld [vmem:[%s870 + $0x4] sm:$0xf]
        %v873 = vld [vmem:[%s870 + $0x8] sm:$0xf]
        %v874 = vld [vmem:[%s870 + $0xc] sm:$0xf]
        %v875 = vld [vmem:[%s870 + $0x10] sm:$0xf]
        %v876 = vld [vmem:[%s870 + $0x14] sm:$0xf]
        %v877 = vld [vmem:[%s870 + $0x18] sm:$0xf]
        %v878 = vld [vmem:[%s870 + $0x1c] sm:$0xf]
        %v879 = vld [vmem:[%s870 + $0x20] sm:$0xf]
        %v880 = vld [vmem:[%s870 + $0x24] sm:$0xf]
        %v881 = vld [vmem:[%s870 + $0x28] sm:$0xf]
        %v882 = vld [vmem:[%s870 + $0x2c] sm:$0xf]
        %v883 = vld [vmem:[%s870 + $0x30] sm:$0xf]
        %v884 = vld [vmem:[%s870 + $0x34] sm:$0xf]
        %v885 = vld [vmem:[%s870 + $0x38] sm:$0xf]
        %v886 = vld [vmem:[%s870 + $0x3c] sm:$0xf]
        %v903 = vunpack.c.l.b16 %v871
        %v904 = vunpack.c.l.b16 %v872
        %v905 = vunpack.c.l.b16 %v873
        %v906 = vunpack.c.l.b16 %v874
        %v907 = vunpack.c.l.b16 %v875
        %v908 = vunpack.c.l.b16 %v876
        %v909 = vunpack.c.l.b16 %v877
        %v910 = vunpack.c.l.b16 %v878
        %v911 = vunpack.c.l.b16 %v879
        %v912 = vunpack.c.l.b16 %v880
        %v913 = vunpack.c.l.b16 %v881
        %v914 = vunpack.c.l.b16 %v882
        %v915 = vunpack.c.l.b16 %v883
        %v916 = vunpack.c.l.b16 %v884
        %v917 = vunpack.c.l.b16 %v885
        %v918 = vunpack.c.l.b16 %v886
        %v919 = vpack.c.b16 %v904, %v903
        %v920 = vpack.c.b16 %v906, %v905
        %v921 = vpack.c.b16 %v908, %v907
        %v922 = vpack.c.b16 %v910, %v909
        %v923 = vpack.c.b16 %v912, %v911
        %v924 = vpack.c.b16 %v914, %v913
        %v925 = vpack.c.b16 %v916, %v915
        %v926 = vpack.c.b16 %v918, %v917
        %935 = vmatprep.subr.bf16.mxu0 0
        %936 = vmatpush1.bf16.msra.mxu0 %v926
        %937 = vmatprep.subr.bf16.mxu0 0
        %938 = vmatpush1.bf16.msra.mxu0 %v925
        %939 = vmatprep.subr.bf16.mxu0 0
        %940 = vmatpush1.bf16.msra.mxu0 %v924
        %941 = vmatprep.subr.bf16.mxu0 0
        %942 = vmatpush1.bf16.msra.mxu0 %v923
        %943 = vmatprep.subr.bf16.mxu0 0
        %944 = vmatpush1.bf16.msra.mxu0 %v922
        %945 = vmatprep.subr.bf16.mxu0 0
        %946 = vmatpush1.bf16.msra.mxu0 %v921
        %947 = vmatprep.subr.bf16.mxu0 0
        %948 = vmatpush1.bf16.msra.mxu0 %v920
        %949 = vmatprep.subr.bf16.mxu0 0
        %950 = vmatpush1.bf16.msra.mxu0 %v919
        %951 = vmatprep.subr.bf16.mxu0 0
        %952 = vmatpush2.bf16.msra.mxu0 0
        %953 = vmatprep.subr.bf16.mxu0 0
        %954 = vmatpush2.bf16.msra.mxu0 0
        %955 = vmatprep.subr.bf16.mxu0 0
        %956 = vmatpush2.bf16.msra.mxu0 0
        %957 = vmatprep.subr.bf16.mxu0 0
        %958 = vmatpush2.bf16.msra.mxu0 0
        %959 = vmatprep.subr.bf16.mxu0 0
        %960 = vmatpush2.bf16.msra.mxu0 0
        %961 = vmatprep.subr.bf16.mxu0 0
        %962 = vmatpush2.bf16.msra.mxu0 0
        %963 = vmatprep.subr.bf16.mxu0 0
        %964 = vmatpush2.bf16.msra.mxu0 0
        %965 = vmatprep.subr.bf16.mxu0 0
        %966 = vmatpush2.bf16.msra.mxu0 0
        %967 = vmatprep.mubr.bf16.mxu0 0
        %968 = vmatmul.mubr.bf16.gmra.mxu0 %v591
        %v969 = vpop.f32.mrf.mxu0
        %v970 = vadd.f32 0.0, %v969
        %v971 = vpop.f32.mrf.mxu0
        %v972 = vpop.f32.mrf.mxu0
        %v973 = vadd.f32 0.0, %v972
        %v974 = vpop.f32.mrf.mxu0
        %975 = vdwg.mxu0
        %976 = vmatprep.subr.bf16.mxu0 0
        %977 = vmatpush1.bf16.msra.mxu0 %v926
        %978 = vmatprep.subr.bf16.mxu0 0
        %979 = vmatpush1.bf16.msra.mxu0 %v925
        %980 = vmatprep.subr.bf16.mxu0 0
        %981 = vmatpush1.bf16.msra.mxu0 %v924
        %982 = vmatprep.subr.bf16.mxu0 0
        %983 = vmatpush1.bf16.msra.mxu0 %v923
        %984 = vmatprep.subr.bf16.mxu0 0
        %985 = vmatpush1.bf16.msra.mxu0 %v922
        %986 = vmatprep.subr.bf16.mxu0 0
        %987 = vmatpush1.bf16.msra.mxu0 %v921
        %988 = vmatprep.subr.bf16.mxu0 0
        %989 = vmatpush1.bf16.msra.mxu0 %v920
        %990 = vmatprep.subr.bf16.mxu0 0
        %991 = vmatpush1.bf16.msra.mxu0 %v919
        %992 = vmatprep.subr.bf16.mxu0 0
        %993 = vmatpush2.bf16.msra.mxu0 0
        %994 = vmatprep.subr.bf16.mxu0 0
        %995 = vmatpush2.bf16.msra.mxu0 0
        %996 = vmatprep.subr.bf16.mxu0 0
        %997 = vmatpush2.bf16.msra.mxu0 0
        %998 = vmatprep.subr.bf16.mxu0 0
        %999 = vmatpush2.bf16.msra.mxu0 0
        %1000 = vmatprep.subr.bf16.mxu0 0
        %1001 = vmatpush2.bf16.msra.mxu0 0
        %1002 = vmatprep.subr.bf16.mxu0 0
        %1003 = vmatpush2.bf16.msra.mxu0 0
        %1004 = vmatprep.subr.bf16.mxu0 0
        %1005 = vmatpush2.bf16.msra.mxu0 0
        %1006 = vmatprep.subr.bf16.mxu0 0
        %1007 = vmatpush2.bf16.msra.mxu0 0
        %1008 = vmatprep.mubr.bf16.mxu0 0
        %1009 = vmatmul.mubr.bf16.gmra.mxu0 %v581
        %v1010 = vpop.f32.mrf.mxu0
        %v1011 = vadd.f32 %v970, %v1010
        %v1012 = vpop.f32.mrf.mxu0
        %v1013 = vpop.f32.mrf.mxu0
        %v1014 = vadd.f32 %v973, %v1013
        %v1015 = vpop.f32.mrf.mxu0
        %1016 = vdwg.mxu0
        %v1019 = vcombine.high %v1011, %v1011
        %v1021 = vunpack.c.l.s4 1966171168
        %v1022 = vunpack.c.0.s8 %v1021
        %v1023 = vlaneseq
        %v1024 = vshrl.u32 %v1023, 7
        %v1025 = vsub.s32 %v1022, %v1024
        %v1026 = vrot.slane %v1011, %v1025
        %v1028 = vunpack.c.l.s4 1966171168
        %v1029 = vunpack.c.0.s8 %v1028
        %v1030 = vlaneseq
        %v1031 = vshrl.u32 %v1030, 7
        %v1032 = vsub.s32 %v1029, %v1031
        %v1033 = vrot.slane %v1019, %v1032
        %v1034 = vcombine.high %v1026, %v1026
        %v1035 = vcombine.high %v1033, %v1033
        %v1037 = vunpack.c.l.s4 1966171168
        %v1038 = vunpack.c.0.s8 %v1037
        %v1039 = vlaneseq
        %v1040 = vshrl.u32 %v1039, 7
        %v1041 = vsub.s32 %v1038, %v1040
        %v1042 = vrot.slane %v1026, %v1041
        %v1044 = vunpack.c.l.s4 1966171168
        %v1045 = vunpack.c.0.s8 %v1044
        %v1046 = vlaneseq
        %v1047 = vshrl.u32 %v1046, 7
        %v1048 = vsub.s32 %v1045, %v1047
        %v1049 = vrot.slane %v1033, %v1048
        %v1051 = vunpack.c.l.s4 1966171168
        %v1052 = vunpack.c.0.s8 %v1051
        %v1053 = vlaneseq
        %v1054 = vshrl.u32 %v1053, 7
        %v1055 = vsub.s32 %v1052, %v1054
        %v1056 = vrot.slane %v1034, %v1055
        %v1058 = vunpack.c.l.s4 1966171168
        %v1059 = vunpack.c.0.s8 %v1058
        %v1060 = vlaneseq
        %v1061 = vshrl.u32 %v1060, 7
        %v1062 = vsub.s32 %v1059, %v1061
        %v1063 = vrot.slane %v1035, %v1062
        %v1064 = vcombine.high %v1042, %v1042
        %v1065 = vcombine.high %v1049, %v1049
        %v1066 = vcombine.high %v1056, %v1056
        %v1067 = vcombine.high %v1063, %v1063
        %v1068 = vcombine.high %v1014, %v1014
        %v1070 = vunpack.c.l.s4 1966171168
        %v1071 = vunpack.c.0.s8 %v1070
        %v1072 = vlaneseq
        %v1073 = vshrl.u32 %v1072, 7
        %v1074 = vsub.s32 %v1071, %v1073
        %v1075 = vrot.slane %v1014, %v1074
        %v1077 = vunpack.c.l.s4 1966171168
        %v1078 = vunpack.c.0.s8 %v1077
        %v1079 = vlaneseq
        %v1080 = vshrl.u32 %v1079, 7
        %v1081 = vsub.s32 %v1078, %v1080
        %v1082 = vrot.slane %v1068, %v1081
        %v1083 = vcombine.high %v1075, %v1075
        %v1084 = vcombine.high %v1082, %v1082
        %v1086 = vunpack.c.l.s4 1966171168
        %v1087 = vunpack.c.0.s8 %v1086
        %v1088 = vlaneseq
        %v1089 = vshrl.u32 %v1088, 7
        %v1090 = vsub.s32 %v1087, %v1089
        %v1091 = vrot.slane %v1075, %v1090
        %v1093 = vunpack.c.l.s4 1966171168
        %v1094 = vunpack.c.0.s8 %v1093
        %v1095 = vlaneseq
        %v1096 = vshrl.u32 %v1095, 7
        %v1097 = vsub.s32 %v1094, %v1096
        %v1098 = vrot.slane %v1082, %v1097
        %v1100 = vunpack.c.l.s4 1966171168
        %v1101 = vunpack.c.0.s8 %v1100
        %v1102 = vlaneseq
        %v1103 = vshrl.u32 %v1102, 7
        %v1104 = vsub.s32 %v1101, %v1103
        %v1105 = vrot.slane %v1083, %v1104
        %v1107 = vunpack.c.l.s4 1966171168
        %v1108 = vunpack.c.0.s8 %v1107
        %v1109 = vlaneseq
        %v1110 = vshrl.u32 %v1109, 7
        %v1111 = vsub.s32 %v1108, %v1110
        %v1112 = vrot.slane %v1084, %v1111
        %v1113 = vcombine.high %v1091, %v1091
        %v1114 = vcombine.high %v1098, %v1098
        %v1115 = vcombine.high %v1105, %v1105
        %v1116 = vcombine.high %v1112, %v1112
        %1133 = vst [vmem:[#allocation3 + $0x1] sm:$0x1] %v1042
        %1134 = vst [vmem:[#allocation3 + $0x3] sm:$0x1] %v1056
        %1135 = vst [vmem:[#allocation3 + $0x5] sm:$0x1] %v1064
        %1136 = vst [vmem:[#allocation3 + $0x7] sm:$0x1] %v1066
        %1137 = vst [vmem:[#allocation3 + $0x9] sm:$0x1] %v1049
        %1138 = vst [vmem:[#allocation3 + $0xb] sm:$0x1] %v1063
        %1139 = vst [vmem:[#allocation3 + $0xd] sm:$0x1] %v1065
        %1140 = vst [vmem:[#allocation3 + $0xf] sm:$0x1] %v1067
        %1141 = vst [vmem:[#allocation3 + $0x11] sm:$0x1] %v1091
        %1142 = vst [vmem:[#allocation3 + $0x13] sm:$0x1] %v1105
        %1143 = vst [vmem:[#allocation3 + $0x15] sm:$0x1] %v1113
        %1144 = vst [vmem:[#allocation3 + $0x17] sm:$0x1] %v1115
        %1145 = vst [vmem:[#allocation3 + $0x19] sm:$0x1] %v1098
        %1146 = vst [vmem:[#allocation3 + $0x1b] sm:$0x1] %v1112
        %1147 = vst [vmem:[#allocation3 + $0x1d] sm:$0x1] %v1114
        %1148 = vst [vmem:[#allocation3 + $0x1f] sm:$0x1] %v1116
      $region40: #{_ctc_loss_impl.1} parent=31 // pred_fallthru
        _
      // Predicated region
      $region41: #{_ctc_loss_impl.1} parent=31 // pred_check
        %p1149 = pneg %p284
      $region42: #{_ctc_loss_impl.1} parent=31 // pred_check_branch
        %1151 = sbr.rel (%p1149) target = $region44
      $region43: #{_ctc_loss_impl.1} parent=31 // pred_region
        %v1152 = vld [vmem:[#allocation3] sm:$0x3]
        %v1154 = vrot.slane %v1152, 3
        %v1155 = vrot.slane %v1152, 4
        %v1158 = vsel %vm282, %v1154, -1e+30
        %v1159 = vsel %vm283, %v1155, -1e+30
        %v1162 = vrot.slane %v1159, 7
        %vm1163 = vcmask 1046534
        %v1164 = vsel %vm1163, %v1162, %v1158
        %1166 = vst [vmem:[#allocation2 - $0x5] sm:$0x60] %v1164
      $region44: #{_ctc_loss_impl.1} parent=31 // pred_fallthru
        _
      %p1167 = scmp.gt.s32.totalorder %s279, 1
      %s1168 = scalar_select %p1167, %s279, 1
      %s1169 = ssub.s32 %s1168, %s279
      %s1170 = ssub.s32 %s278, %s279
      %p1171 = scmp.gt.s32.totalorder %s1170, 0
      %s1172 = scalar_select %p1171, %s1170, 0
      %p1173 = scmp.lt.s32.totalorder %s1172, 16
      %s1174 = scalar_select %p1173, %s1172, 16
      %v1175 = vld [vmem:[#allocation2] sm:$0x3]
      // While loop
      $region45: #{_ctc_loss_impl.1} parent=31 // loop_pre_header
        _
      $region46: #{_ctc_loss_impl.1} parent=31 // loop_header
        %s1177 = sphi %s1169, %s1179
        %p1178 = scmp.ge.s32.totalorder %s1177, %s1174
        %v1182 = vphi %v1175, %v1281
      $region47: #{_ctc_loss_impl.1} parent=31 // loop_header_branch
        %1181 = sbr.rel (%p1178) target = $region51
      $region48: #{_ctc_loss_impl.1} parent=31 // loop_body
        %1183 = vrot.lane.b32.xlu0 %v1182, 1
        %v1184 = vpop.permute.xlu0 %1183
        %v1186 = vrot.slane %v1184, 7
        %v1189 = vsel %vm282, %v1186, -1e+30
        %v1190 = vsel %vm283, %v1184, -1e+30
        %1191 = vrot.lane.b32.xlu0 %v1182, 2
        %v1192 = vpop.permute.xlu0 %1191
        %v1194 = vrot.slane %v1192, 6
        %v1195 = vrot.slane %v1192, 7
        %v1198 = vsel %vm282, %v1194, -1e+30
        %v1199 = vsel %vm283, %v1195, -1e+30
        %v1202 = vrot.slane %v1189, 1
        %vm1203 = vcmask 1041409
        %v1204 = vsel %vm1203, %v1190, %v1202
        %v1206 = vmax.f32 %v1182, %v1204
        %v1209 = vrot.slane %v1198, 2
        %v1210 = vrot.slane %v1199, 1
        %v1211 = vsel %vm1203, %v1210, %v1209
        %v1213 = vmax.f32 %v1206, %v1211
        %v1214 = vsub.f32 %v1182, %v1213
        %v1215 = vmul.f32 %v1214, 1.442695
        %v1216 = vpow.pop %v1215
        %v1218 = vrot.slane %v1213, 7
        %v1221 = vsub.f32 %v1189, %v1218
        %v1222 = vsub.f32 %v1190, %v1213
        %v1223 = vmul.f32 %v1221, 1.442695
        %v1224 = vpow.pop %v1223
        %v1225 = vmul.f32 %v1222, 1.442695
        %v1226 = vpow.pop %v1225
        %v1229 = vrot.slane %v1224, 1
        %v1230 = vsel %vm1203, %v1226, %v1229
        %v1232 = vadd.f32 %v1216, %v1230
        %v1233 = vrot.slane %v1213, 6
        %v1235 = vsub.f32 %v1198, %v1233
        %v1236 = vsub.f32 %v1199, %v1218
        %v1237 = vmul.f32 %v1235, 1.442695
        %v1238 = vpow.pop %v1237
        %v1239 = vmul.f32 %v1236, 1.442695
        %v1240 = vpow.pop %v1239
        %v1243 = vrot.slane %v1238, 2
        %v1244 = vrot.slane %v1240, 1
        %v1245 = vsel %vm1203, %v1244, %v1243
        %v1247 = vadd.f32 %v1232, %v1245
        %v1248 = vlog2.pop %v1247
        %v1249 = vmul.f32 %v1248, 0.6931472
        %v1250 = vadd.f32 %v1213, %v1249
        %s1251 = smul.u32 %s1177, 2
        %s1252 = scalar_lea.vmem [#allocation3], %s1251
        %v1253 = vld [vmem:[%s1252] sm:$0x3]
        %s1254 = sadd.s32 %s279, %s1177
        %s1255 = scvt.s32.f32 %s1254
        %v1256 = vstv %s1255
        %vm1257 = vcmp.lt.f32.partialorder %v1256, %v280
        %vm1258 = vcmp.lt.f32.partialorder %v1256, %v281
        %v1259 = vsel %vm1257, 1, 0
        %v1260 = vsel %vm1258, 1, 0
        %v1261 = vrot.slane %v1259, 4
        %v1262 = vrot.slane %v1260, 4
        %vm1263 = vcmp.ne.s32.totalorder %v1261, 0
        %vm1264 = vcmp.ne.s32.totalorder %v1262, 0
        %vm1265 = vmand %vm282, %vm1263
        %vm1266 = vmand %vm283, %vm1264
        %v1267 = vadd.f32 %v1250, %v1253
        %v1269 = vrot.slane %v1267, 1
        %v1273 = vrot.slane %v1182, 1
        %v1276 = vsel %vm1265, %v1267, %v1182
        %v1277 = vsel %vm1266, %v1269, %v1273
        %v1280 = vrot.slane %v1277, 7
        %v1281 = vsel %vm1203, %v1280, %v1276
      $region49: #{_ctc_loss_impl.1} parent=31 // loop_footer
        %s1179 = sadd.s32 %s1177, 1
      $region50: #{_ctc_loss_impl.1} parent=31 // loop_footer_branch
        %1176 = sbr.rel target = $region46
      $region51: #{_ctc_loss_impl.1} parent=31 // loop_exit
        _
      %1283 = vst [vmem:[#allocation2] sm:$0x3] %v1182
      // Predicated region
      $region52: #{_ctc_loss_impl.1} parent=31 // pred_check
        %p1284 = pneg %p284
      $region53: #{_ctc_loss_impl.1} parent=31 // pred_check_branch
        %1286 = sbr.rel (%p1284) target = $region55
      $region54: #{_ctc_loss_impl.1} parent=31 // pred_region
        %v1287 = vld [vmem:[#allocation2] sm:$0x3]
        %v1289 = vrot.slane %v1287, 5
        %v1290 = vrot.slane %v1287, 6
        %v1293 = vsel %vm282, %v1289, -1e+30
        %v1294 = vsel %vm283, %v1290, -1e+30
        %v1297 = vrot.slane %v1294, 7
        %vm1298 = vcmask 1044484
        %v1299 = vsel %vm1298, %v1297, %v1293
        %vm1301 = vcmask 1044483
        %v1302 = vsel %vm1301, %v1299, -inf
        %1303 = vmax.xlane.f32.xlu0 %v1302
        %v1304 = vpop.xlane.xlu0 %1303
        %v1306 = vrot.slane %v1304, 1
        %v1309 = vsub.f32 %v1293, %v1304
        %v1310 = vsub.f32 %v1294, %v1306
        %v1311 = vmul.f32 %v1309, 1.442695
        %v1312 = vpow.pop %v1311
        %v1313 = vmul.f32 %v1310, 1.442695
        %v1314 = vpow.pop %v1313
        %v1317 = vrot.slane %v1314, 7
        %v1318 = vsel %vm1298, %v1317, %v1312
        %v1320 = vsel %vm1301, %v1318, 0.0
        %1321 = vadd.xlane.f32.xlu0 %v1320
        %v1322 = vpop.xlane.xlu0 %1321
        %v1323 = vlog2.pop %v1322
        %v1324 = vmul.f32 %v1323, 0.6931472
        %v1325 = vadd.f32 %v1304, %v1324
        %v1326 = vsub.f32 0.0, %v1325
        %v1328 = vlaneseq
        %v1329 = vshrl.u32 %v1328, 7
        %v1330 = vsub.s32 3, %v1329
        %v1331 = vrot.slane %v1326, %v1330
        %v1332 = vlaneseq
        %v1333 = vshrl.u32 %v1332, 7
        %v1334 = vsub.s32 4, %v1333
        %v1335 = vrot.slane %v1326, %v1334
        %1338 = vst [vmem:[%s275] sm:$0x1] %v1331
        %1339 = vst [vmem:[%s275 + $0x1] sm:$0x1] %v1335
      $region55: #{_ctc_loss_impl.1} parent=31 // pred_fallthru
        _
      %s1340 = smul.u32 2, %s30
      %p1341 = scmp.lt.s32.totalorder %s1340, 3
      %s1342 = scalar_select %p1341, %s1340, 3
      %s1343 = scalar_lea.vmem %s5, %s1342
      // Predicated region
      $region56: #{_ctc_loss_impl.1} parent=31 // pred_check
        %p1344 = pneg %p142
      $region57: #{_ctc_loss_impl.1} parent=31 // pred_check_branch
        %1346 = sbr.rel (%p1344) target = $region59
      $region58: #{_ctc_loss_impl.1} parent=31 // pred_region
        %s1347 = smul.u32 2, %s30
      $region59: #{_ctc_loss_impl.1} parent=31 // pred_fallthru
        _
    $region32: #{_ctc_loss_impl.1} parent=5 // pred_fallthru
      _
    %p1348 = scmp.le.s32.totalorder 2, %s21
    // Predicated region
    $region60: #{_ctc_loss_impl.1} parent=5 // pred_check
      %p1349 = pneg %p1348
    $region61: #{_ctc_loss_impl.1} parent=5 // pred_check_branch
      %1351 = sbr.rel (%p1349) target = $region63
    $region62: #{_ctc_loss_impl.1} parent=5 // pred_region
      %s1352 = ssub.s32 %s21, 2
      // Predicated region
      $region64: #{_ctc_loss_impl.1} parent=62 // pred_check
        %p1353 = pneg %p148
      $region65: #{_ctc_loss_impl.1} parent=62 // pred_check_branch
        %1355 = sbr.rel (%p1353) target = $region67
      $region66: #{_ctc_loss_impl.1} parent=62 // pred_region
        %s1356 = smul.u32 2, %s32
        %p1357 = scmp.lt.s32.totalorder %s1356, 3
        %s1358 = scalar_select %p1357, %s1356, 3
        %s1359 = scalar_lea.vmem %s5, %s1358
      $region67: #{_ctc_loss_impl.1} parent=62 // pred_fallthru
        _
    $region63: #{_ctc_loss_impl.1} parent=5 // pred_fallthru
      _
  $region6: #{_ctc_loss_impl.1} parent=0 // loop_footer
    %s25 = sadd.s32 1, %s21
  $region7: #{_ctc_loss_impl.1} parent=0 // loop_footer_branch
    %20 = sbr.rel target = $region3
  $region8: #{_ctc_loss_impl.1} parent=0 // loop_exit
    _

</llo_original>
